<compile_context>
chip_gen: v7x
topology: tpu7x:2x2x1
jax: 0.10.0
libtpu: 0.0.40
codegen_flags: <defaults>
</compile_context>

<pallas_src>
import functools

import jax
import jax.numpy as jnp
import numpy as np
from jax import lax
from jax.experimental import pallas as pl
from jax.experimental.pallas import tpu as pltpu

EPS = 1e-6                      # LayerNorm eps used by the reference transformer implementation
_COMPUTE_DTYPE = jnp.bfloat16   # MXU-native matmul input dtype; accumulation stays f32


def _layer_norm(x, gamma, beta):
    mu = jnp.mean(x, axis=-1, keepdims=True)
    var = jnp.mean(jnp.square(x - mu), axis=-1, keepdims=True)
    return (x - mu) * lax.rsqrt(var + EPS) * gamma + beta


def encoder_layer_kernel(n_head, d_k, d_v,
                         xq_ref, xkv_ref,
                         wq_ref, bq_ref, wk_ref, bk_ref, wv_ref, bv_ref,
                         wo3_ref, bo_ref, ln1_g_ref, ln1_b_ref,
                         w1_ref, b1_ref, w2_ref, b2_ref, ln2_g_ref, ln2_b_ref,
                         out_ref):
    cdt = _COMPUTE_DTYPE
    x_q = xq_ref[0]          # (Tq, D) query rows handled by this grid step (also the residual)
    x_kv = xkv_ref[0]        # (S,  D) full sequence for keys / values

    xq_c = x_q.astype(cdt)
    xkv_c = x_kv.astype(cdt)

    # --- QKV projections: lane-dense 2-D matmuls (N = n_head*d_k), bf16 in / f32 acc -------
    q = jnp.dot(xq_c, wq_ref[...].astype(cdt), preferred_element_type=jnp.float32) + bq_ref[...]
    k = jnp.dot(xkv_c, wk_ref[...].astype(cdt), preferred_element_type=jnp.float32) + bk_ref[...]
    v = jnp.dot(xkv_c, wv_ref[...].astype(cdt), preferred_element_type=jnp.float32) + bv_ref[...]

    # Fold 1/sqrt(d_k) into q: Tq*D elementwise ops instead of n_head*Tq*S on the scores.
    q = q * (1.0 / float(d_k) ** 0.5)

    # Head-major (n_head, rows, d) layout: static lane slices stacked on a new MAJOR axis
    # (major-axis concat only — no minor-dim reshape/transpose inside the kernel).
    q3 = jnp.stack([q[:, h * d_k:(h + 1) * d_k] for h in range(n_head)], axis=0).astype(cdt)
    k3 = jnp.stack([k[:, h * d_k:(h + 1) * d_k] for h in range(n_head)], axis=0).astype(cdt)
    v3 = jnp.stack([v[:, h * d_v:(h + 1) * d_v] for h in range(n_head)], axis=0).astype(cdt)

    # --- Attention: ONE batched contraction per step (head = leading batch dim). -----------
    # Contract d_k directly; no kh.T materialization.
    scores = jnp.einsum("hqd,hkd->hqk", q3, k3,
                        preferred_element_type=jnp.float32)          # (n_head, Tq, S), f32
    # TODO(synk): slf_attn_mask support; only the mask=None path is implemented.
    # TODO(synk): for long S, switch to an online-softmax (flash-style) KV-tile loop so the
    #             (n_head, Tq, S) scores slab is never fully materialized.
    m = jnp.max(scores, axis=-1, keepdims=True)
    e = jnp.exp(scores - m)
    attn = e * pl.reciprocal(jnp.sum(e, axis=-1, keepdims=True), approx=True)

    o3 = jnp.einsum("hqk,hkd->hqd", attn.astype(cdt), v3,
                    preferred_element_type=jnp.float32)               # (n_head, Tq, d_v)

    # --- Output projection: head-batched matmul + major-axis sum (wo pre-split host-side to
    #     (n_head, d_v, D)); avoids the lane-fragmented per-head concat entirely. -----------
    o_proj = jnp.einsum("hqd,hdm->hqm", o3.astype(cdt), wo3_ref[...].astype(cdt),
                        preferred_element_type=jnp.float32)           # (n_head, Tq, D)
    attn_out = jnp.sum(o_proj, axis=0) + bo_ref[...]
    # dropout == identity in eval mode
    attn_out = _layer_norm(attn_out + x_q, ln1_g_ref[...], ln1_b_ref[...])

    # --- Position-wise feed-forward ---------------------------------------------------------
    # TODO(synk): for very large dim_hid, stream W1/W2 over an extra "arbitrary" grid axis
    #             with a VMEM f32 accumulator instead of keeping them fully resident.
    h1 = jnp.dot(attn_out.astype(cdt), w1_ref[...].astype(cdt),
                 preferred_element_type=jnp.float32) + b1_ref[...]
    h1 = jnp.maximum(h1, 0.0)
    ffn = jnp.dot(h1.astype(cdt), w2_ref[...].astype(cdt),
                  preferred_element_type=jnp.float32) + b2_ref[...]
    out = _layer_norm(ffn + attn_out, ln2_g_ref[...], ln2_b_ref[...])

    out_ref[0] = out.astype(out_ref.dtype)


PARAM_ORDER = ("wq", "bq", "wk", "bk", "wv", "bv",
               "wo", "bo", "ln1_g", "ln1_b",
               "w1", "b1", "w2", "b2", "ln2_g", "ln2_b")


def encoder_layer(x, params, *, n_head, d_k, d_v, seq_tile=None):
    B, S, D = x.shape
    if seq_tile is None:
        seq_tile = S if S <= 512 else 512
    assert S % seq_tile == 0, "seq_len must be a multiple of seq_tile"

    # Pre-split the output projection on the host: (n_head*d_v, D) -> (n_head, d_v, D), so the
    # kernel can apply it as a head-batched matmul and never re-concatenates head strips.
    weights = []
    for name in PARAM_ORDER:
        w = params[name]
        if name == "wo":
            w = w.reshape(n_head, d_v, D)
        weights.append(w)

    def full_spec(a):
        nd = a.ndim
        return pl.BlockSpec(a.shape, lambda b, i, _nd=nd: (0,) * _nd)

    in_specs = ([pl.BlockSpec((1, seq_tile, D), lambda b, i: (b, i, 0)),   # query-row tile
                 pl.BlockSpec((1, S, D), lambda b, i: (b, 0, 0))]          # full seq for K/V
                + [full_spec(w) for w in weights])
    out_spec = pl.BlockSpec((1, seq_tile, D), lambda b, i: (b, i, 0))

    kernel = functools.partial(encoder_layer_kernel, n_head, d_k, d_v)
    return pl.pallas_call(
        kernel,
        out_shape=jax.ShapeDtypeStruct((B, S, D), x.dtype),
        grid=(B, S // seq_tile),
        in_specs=in_specs,
        out_specs=out_spec,
        compiler_params=pltpu.CompilerParams(
            # batch and sequence tiles are independent -> megacore-shardable (v7x: 2 TCs)
            dimension_semantics=("parallel", "parallel"),
            # raise the scoped-VMEM limit above the v5e(16MiB)/v6e(32MiB) defaults so the
            # resident weights + scores slab are not rejected/spilled at realistic sizes
            vmem_limit_bytes=64 * 1024 * 1024,
        ),
    )(x, x, *weights)


def init_params(key, dim_model, dim_hid, n_head, d_k, d_v):
    ks = jax.random.split(key, 8)
    s = 0.02
    return {
        "wq": s * jax.random.normal(ks[0], (dim_model, n_head * d_k), jnp.float32),
        "bq": jnp.zeros((1, n_head * d_k), jnp.float32),
        "wk": s * jax.random.normal(ks[1], (dim_model, n_head * d_k), jnp.float32),
        "bk": jnp.zeros((1, n_head * d_k), jnp.float32),
        "wv": s * jax.random.normal(ks[2], (dim_model, n_head * d_v), jnp.float32),
        "bv": jnp.zeros((1, n_head * d_v), jnp.float32),
        "wo": s * jax.random.normal(ks[3], (n_head * d_v, dim_model), jnp.float32),
        "bo": s * jax.random.normal(ks[4], (1, dim_model), jnp.float32),
        "ln1_g": jnp.ones((1, dim_model), jnp.float32),
        "ln1_b": jnp.zeros((1, dim_model), jnp.float32),
        "w1": s * jax.random.normal(ks[5], (dim_model, dim_hid), jnp.float32),
        "b1": s * jax.random.normal(ks[6], (1, dim_hid), jnp.float32),
        "w2": s * jax.random.normal(ks[7], (dim_hid, dim_model), jnp.float32),
        "b2": jnp.zeros((1, dim_model), jnp.float32),
        "ln2_g": jnp.ones((1, dim_model), jnp.float32),
        "ln2_b": jnp.zeros((1, dim_model), jnp.float32),
    }


def encoder_layer_ref(x, p, *, n_head, d_k, d_v):
    """Pure-JAX f32 reference for correctness checking."""
    B, S, D = x.shape
    q = x @ p["wq"] + p["bq"]
    k = x @ p["wk"] + p["bk"]
    v = x @ p["wv"] + p["bv"]
    q = q.reshape(B, S, n_head, d_k).transpose(0, 2, 1, 3)
    k = k.reshape(B, S, n_head, d_k).transpose(0, 2, 1, 3)
    v = v.reshape(B, S, n_head, d_v).transpose(0, 2, 1, 3)
    scores = jnp.einsum("bhqd,bhkd->bhqk", q, k) / (d_k ** 0.5)
    attn = jax.nn.softmax(scores, axis=-1)
    o = jnp.einsum("bhqk,bhkd->bhqd", attn, v).transpose(0, 2, 1, 3).reshape(B, S, n_head * d_v)
    o = o @ p["wo"] + p["bo"]

    def ln(y, g, b):
        mu = y.mean(-1, keepdims=True)
        var = ((y - mu) ** 2).mean(-1, keepdims=True)
        return (y - mu) * lax.rsqrt(var + EPS) * g + b

    a = ln(o + x, p["ln1_g"], p["ln1_b"])
    h = jnp.maximum(a @ p["w1"] + p["b1"], 0.0)
    f = h @ p["w2"] + p["b2"]
    return ln(f + a, p["ln2_g"], p["ln2_b"])


if __name__ == "__main__":
    # Small but lane-dense shapes: d_model = n_head*d_k = n_head*d_v = 128, dim_hid = 256.
    B, S = 2, 8
    dim_model, dim_hid = 128, 256
    n_head, d_k, d_v = 4, 32, 32

    key = jax.random.PRNGKey(0)
    kx, kp = jax.random.split(key)
    x = jax.random.normal(kx, (B, S, dim_model), jnp.float32)
    params = init_params(kp, dim_model, dim_hid, n_head, d_k, d_v)

    out = encoder_layer(x, params, n_head=n_head, d_k=d_k, d_v=d_v)
    out = jax.block_until_ready(out)

    ref = encoder_layer_ref(x, params, n_head=n_head, d_k=d_k, d_v=d_v)
    # bf16 matmul inputs + approx reciprocal -> slightly looser tolerance than pure f32.
    np.testing.assert_allclose(np.asarray(out), np.asarray(ref), rtol=2e-2, atol=2e-2)

    print("KERNEL_OK")
</pallas_src>

<mosaic_0001>
module attributes {stable_mosaic.version = 11 : i64} {
  func.func @encoder_layer_kernel(%arg0: i32, %arg1: i32, %arg2: memref<1x8x128xf32, #tpu.memory_space<vmem>>, %arg3: memref<1x8x128xf32, #tpu.memory_space<vmem>>, %arg4: memref<128x128xf32, #tpu.memory_space<vmem>>, %arg5: memref<1x128xf32, #tpu.memory_space<vmem>>, %arg6: memref<128x128xf32, #tpu.memory_space<vmem>>, %arg7: memref<1x128xf32, #tpu.memory_space<vmem>>, %arg8: memref<128x128xf32, #tpu.memory_space<vmem>>, %arg9: memref<1x128xf32, #tpu.memory_space<vmem>>, %arg10: memref<4x32x128xf32, #tpu.memory_space<vmem>>, %arg11: memref<1x128xf32, #tpu.memory_space<vmem>>, %arg12: memref<1x128xf32, #tpu.memory_space<vmem>>, %arg13: memref<1x128xf32, #tpu.memory_space<vmem>>, %arg14: memref<128x256xf32, #tpu.memory_space<vmem>>, %arg15: memref<1x256xf32, #tpu.memory_space<vmem>>, %arg16: memref<256x128xf32, #tpu.memory_space<vmem>>, %arg17: memref<1x128xf32, #tpu.memory_space<vmem>>, %arg18: memref<1x128xf32, #tpu.memory_space<vmem>>, %arg19: memref<1x128xf32, #tpu.memory_space<vmem>>, %arg20: memref<1x8x128xf32, #tpu.memory_space<vmem>>) attributes {dimension_semantics = [#tpu.dimension_semantics<parallel>, #tpu.dimension_semantics<parallel>], iteration_bounds = array<i64: 2, 1>, scalar_prefetch = 0 : i64, scratch_operands = 0 : i64, tpu.core_type = #tpu.core_type<tc>, window_params = [{transform_indices = @transform_0, window_bounds = array<i64: 1, 8, 128>}, {transform_indices = @transform_1, window_bounds = array<i64: 1, 8, 128>}, {pipeline_mode = #tpu.pipeline_mode<synchronous>, transform_indices = @transform_2, window_bounds = array<i64: 128, 128>}, {pipeline_mode = #tpu.pipeline_mode<synchronous>, transform_indices = @transform_3, window_bounds = array<i64: 1, 128>}, {pipeline_mode = #tpu.pipeline_mode<synchronous>, transform_indices = @transform_4, window_bounds = array<i64: 128, 128>}, {pipeline_mode = #tpu.pipeline_mode<synchronous>, transform_indices = @transform_5, window_bounds = array<i64: 1, 128>}, {pipeline_mode = #tpu.pipeline_mode<synchronous>, transform_indices = @transform_6, window_bounds = array<i64: 128, 128>}, {pipeline_mode = #tpu.pipeline_mode<synchronous>, transform_indices = @transform_7, window_bounds = array<i64: 1, 128>}, {pipeline_mode = #tpu.pipeline_mode<synchronous>, transform_indices = @transform_8, window_bounds = array<i64: 4, 32, 128>}, {pipeline_mode = #tpu.pipeline_mode<synchronous>, transform_indices = @transform_9, window_bounds = array<i64: 1, 128>}, {pipeline_mode = #tpu.pipeline_mode<synchronous>, transform_indices = @transform_10, window_bounds = array<i64: 1, 128>}, {pipeline_mode = #tpu.pipeline_mode<synchronous>, transform_indices = @transform_11, window_bounds = array<i64: 1, 128>}, {pipeline_mode = #tpu.pipeline_mode<synchronous>, transform_indices = @transform_12, window_bounds = array<i64: 128, 256>}, {pipeline_mode = #tpu.pipeline_mode<synchronous>, transform_indices = @transform_13, window_bounds = array<i64: 1, 256>}, {pipeline_mode = #tpu.pipeline_mode<synchronous>, transform_indices = @transform_14, window_bounds = array<i64: 256, 128>}, {pipeline_mode = #tpu.pipeline_mode<synchronous>, transform_indices = @transform_15, window_bounds = array<i64: 1, 128>}, {pipeline_mode = #tpu.pipeline_mode<synchronous>, transform_indices = @transform_16, window_bounds = array<i64: 1, 128>}, {pipeline_mode = #tpu.pipeline_mode<synchronous>, transform_indices = @transform_17, window_bounds = array<i64: 1, 128>}, {transform_indices = @transform_18, window_bounds = array<i64: 1, 8, 128>}]} {
    %c0 = arith.constant 0 : index
    %c0_0 = arith.constant 0 : index
    %c0_1 = arith.constant 0 : index
    %0 = vector.load %arg2[%c0, %c0_0, %c0_1] : memref<1x8x128xf32, #tpu.memory_space<vmem>>, vector<1x8x128xf32>
    %1 = vector.shape_cast %0 : vector<1x8x128xf32> to vector<8x128xf32>
    %c0_2 = arith.constant 0 : index
    %c0_3 = arith.constant 0 : index
    %c0_4 = arith.constant 0 : index
    %2 = vector.load %arg3[%c0_2, %c0_3, %c0_4] : memref<1x8x128xf32, #tpu.memory_space<vmem>>, vector<1x8x128xf32>
    %3 = vector.shape_cast %2 : vector<1x8x128xf32> to vector<8x128xf32>
    %4 = arith.truncf %1 : vector<8x128xf32> to vector<8x128xbf16>
    %5 = arith.truncf %3 : vector<8x128xf32> to vector<8x128xbf16>
    %c0_5 = arith.constant 0 : index
    %c0_6 = arith.constant 0 : index
    %6 = vector.load %arg4[%c0_5, %c0_6] : memref<128x128xf32, #tpu.memory_space<vmem>>, vector<128x128xf32>
    %7 = arith.truncf %6 : vector<128x128xf32> to vector<128x128xbf16>
    %cst = arith.constant dense<0.000000e+00> : vector<8x128xf32>
    %8 = tpu.matmul %4, %7, %cst {dimension_numbers = #tpu.dot_dimension_numbers<[1], [0], [0], [1], [0, 0, 1, 1], [], []>} : vector<8x128xbf16>, vector<128x128xbf16>, vector<8x128xf32> -> vector<8x128xf32>
    %c0_7 = arith.constant 0 : index
    %c0_8 = arith.constant 0 : index
    %9 = vector.load %arg5[%c0_7, %c0_8] : memref<1x128xf32, #tpu.memory_space<vmem>>, vector<1x128xf32>
    %10 = vector.broadcast %9 : vector<1x128xf32> to vector<8x128xf32>
    %11 = arith.addf %8, %10 : vector<8x128xf32>
    %c0_9 = arith.constant 0 : index
    %c0_10 = arith.constant 0 : index
    %12 = vector.load %arg6[%c0_9, %c0_10] : memref<128x128xf32, #tpu.memory_space<vmem>>, vector<128x128xf32>
    %13 = arith.truncf %12 : vector<128x128xf32> to vector<128x128xbf16>
    %cst_11 = arith.constant dense<0.000000e+00> : vector<8x128xf32>
    %14 = tpu.matmul %5, %13, %cst_11 {dimension_numbers = #tpu.dot_dimension_numbers<[1], [0], [0], [1], [0, 0, 1, 1], [], []>} : vector<8x128xbf16>, vector<128x128xbf16>, vector<8x128xf32> -> vector<8x128xf32>
    %c0_12 = arith.constant 0 : index
    %c0_13 = arith.constant 0 : index
    %15 = vector.load %arg7[%c0_12, %c0_13] : memref<1x128xf32, #tpu.memory_space<vmem>>, vector<1x128xf32>
    %16 = vector.broadcast %15 : vector<1x128xf32> to vector<8x128xf32>
    %17 = arith.addf %14, %16 : vector<8x128xf32>
    %c0_14 = arith.constant 0 : index
    %c0_15 = arith.constant 0 : index
    %18 = vector.load %arg8[%c0_14, %c0_15] : memref<128x128xf32, #tpu.memory_space<vmem>>, vector<128x128xf32>
    %19 = arith.truncf %18 : vector<128x128xf32> to vector<128x128xbf16>
    %cst_16 = arith.constant dense<0.000000e+00> : vector<8x128xf32>
    %20 = tpu.matmul %5, %19, %cst_16 {dimension_numbers = #tpu.dot_dimension_numbers<[1], [0], [0], [1], [0, 0, 1, 1], [], []>} : vector<8x128xbf16>, vector<128x128xbf16>, vector<8x128xf32> -> vector<8x128xf32>
    %c0_17 = arith.constant 0 : index
    %c0_18 = arith.constant 0 : index
    %21 = vector.load %arg9[%c0_17, %c0_18] : memref<1x128xf32, #tpu.memory_space<vmem>>, vector<1x128xf32>
    %22 = vector.broadcast %21 : vector<1x128xf32> to vector<8x128xf32>
    %23 = arith.addf %20, %22 : vector<8x128xf32>
    %cst_19 = arith.constant 0.176776692 : f32
    %24 = vector.broadcast %cst_19 : f32 to vector<8x128xf32>
    %25 = arith.mulf %11, %24 : vector<8x128xf32>
    %26 = vector.extract_strided_slice %25 {offsets = [0, 0], sizes = [8, 32], strides = [1, 1]} : vector<8x128xf32> to vector<8x32xf32>
    %27 = vector.extract_strided_slice %25 {offsets = [0, 32], sizes = [8, 32], strides = [1, 1]} : vector<8x128xf32> to vector<8x32xf32>
    %28 = vector.extract_strided_slice %25 {offsets = [0, 64], sizes = [8, 32], strides = [1, 1]} : vector<8x128xf32> to vector<8x32xf32>
    %29 = vector.extract_strided_slice %25 {offsets = [0, 96], sizes = [8, 32], strides = [1, 1]} : vector<8x128xf32> to vector<8x32xf32>
    %30 = vector.shape_cast %26 : vector<8x32xf32> to vector<1x8x32xf32>
    %31 = vector.shape_cast %27 : vector<8x32xf32> to vector<1x8x32xf32>
    %32 = vector.shape_cast %28 : vector<8x32xf32> to vector<1x8x32xf32>
    %33 = vector.shape_cast %29 : vector<8x32xf32> to vector<1x8x32xf32>
    %34 = tpu.concatenate %30, %31, %32, %33 in 0 : vector<1x8x32xf32>, vector<1x8x32xf32>, vector<1x8x32xf32>, vector<1x8x32xf32> -> vector<4x8x32xf32>
    %35 = arith.truncf %34 : vector<4x8x32xf32> to vector<4x8x32xbf16>
    %36 = vector.extract_strided_slice %17 {offsets = [0, 0], sizes = [8, 32], strides = [1, 1]} : vector<8x128xf32> to vector<8x32xf32>
    %37 = vector.extract_strided_slice %17 {offsets = [0, 32], sizes = [8, 32], strides = [1, 1]} : vector<8x128xf32> to vector<8x32xf32>
    %38 = vector.extract_strided_slice %17 {offsets = [0, 64], sizes = [8, 32], strides = [1, 1]} : vector<8x128xf32> to vector<8x32xf32>
    %39 = vector.extract_strided_slice %17 {offsets = [0, 96], sizes = [8, 32], strides = [1, 1]} : vector<8x128xf32> to vector<8x32xf32>
    %40 = vector.shape_cast %36 : vector<8x32xf32> to vector<1x8x32xf32>
    %41 = vector.shape_cast %37 : vector<8x32xf32> to vector<1x8x32xf32>
    %42 = vector.shape_cast %38 : vector<8x32xf32> to vector<1x8x32xf32>
    %43 = vector.shape_cast %39 : vector<8x32xf32> to vector<1x8x32xf32>
    %44 = tpu.concatenate %40, %41, %42, %43 in 0 : vector<1x8x32xf32>, vector<1x8x32xf32>, vector<1x8x32xf32>, vector<1x8x32xf32> -> vector<4x8x32xf32>
    %45 = arith.truncf %44 : vector<4x8x32xf32> to vector<4x8x32xbf16>
    %46 = vector.extract_strided_slice %23 {offsets = [0, 0], sizes = [8, 32], strides = [1, 1]} : vector<8x128xf32> to vector<8x32xf32>
    %47 = vector.extract_strided_slice %23 {offsets = [0, 32], sizes = [8, 32], strides = [1, 1]} : vector<8x128xf32> to vector<8x32xf32>
    %48 = vector.extract_strided_slice %23 {offsets = [0, 64], sizes = [8, 32], strides = [1, 1]} : vector<8x128xf32> to vector<8x32xf32>
    %49 = vector.extract_strided_slice %23 {offsets = [0, 96], sizes = [8, 32], strides = [1, 1]} : vector<8x128xf32> to vector<8x32xf32>
    %50 = vector.shape_cast %46 : vector<8x32xf32> to vector<1x8x32xf32>
    %51 = vector.shape_cast %47 : vector<8x32xf32> to vector<1x8x32xf32>
    %52 = vector.shape_cast %48 : vector<8x32xf32> to vector<1x8x32xf32>
    %53 = vector.shape_cast %49 : vector<8x32xf32> to vector<1x8x32xf32>
    %54 = tpu.concatenate %50, %51, %52, %53 in 0 : vector<1x8x32xf32>, vector<1x8x32xf32>, vector<1x8x32xf32>, vector<1x8x32xf32> -> vector<4x8x32xf32>
    %55 = arith.truncf %54 : vector<4x8x32xf32> to vector<4x8x32xbf16>
    "tpu.trace_start"() <{level = 10 : i32, message = "hqd,hkd->hqk"}> : () -> ()
    %cst_20 = arith.constant dense<0.000000e+00> : vector<4x8x8xf32>
    %56 = tpu.matmul %35, %45, %cst_20 {dimension_numbers = #tpu.dot_dimension_numbers<[2], [2], [1], [1], [0, 0, 0, 1, 1, 1], [0], [0]>} : vector<4x8x32xbf16>, vector<4x8x32xbf16>, vector<4x8x8xf32> -> vector<4x8x8xf32>
    "tpu.trace_stop"() : () -> ()
    %cst_21 = arith.constant dense<0xFF800000> : vector<4x8xf32>
    %57 = vector.multi_reduction <maximumf>, %56, %cst_21 [2] : vector<4x8x8xf32> to vector<4x8xf32>
    %58 = vector.shape_cast %57 : vector<4x8xf32> to vector<4x8x1xf32>
    %59 = vector.broadcast %58 : vector<4x8x1xf32> to vector<4x8x8xf32>
    %60 = arith.subf %56, %59 : vector<4x8x8xf32>
    %61 = math.exp %60 : vector<4x8x8xf32>
    %cst_22 = arith.constant dense<0.000000e+00> : vector<4x8xf32>
    %62 = vector.multi_reduction <add>, %61, %cst_22 [2] : vector<4x8x8xf32> to vector<4x8xf32>
    %63 = vector.shape_cast %62 : vector<4x8xf32> to vector<4x8x1xf32>
    %64 = tpu.reciprocal %63 {approx = true} : vector<4x8x1xf32> -> vector<4x8x1xf32>
    %65 = vector.broadcast %64 : vector<4x8x1xf32> to vector<4x8x8xf32>
    %66 = arith.mulf %61, %65 : vector<4x8x8xf32>
    %67 = arith.truncf %66 : vector<4x8x8xf32> to vector<4x8x8xbf16>
    "tpu.trace_start"() <{level = 10 : i32, message = "hqk,hkd->hqd"}> : () -> ()
    %cst_23 = arith.constant dense<0.000000e+00> : vector<4x8x32xf32>
    %68 = tpu.matmul %67, %55, %cst_23 {dimension_numbers = #tpu.dot_dimension_numbers<[2], [1], [1], [2], [0, 0, 0, 1, 1, 2], [0], [0]>} : vector<4x8x8xbf16>, vector<4x8x32xbf16>, vector<4x8x32xf32> -> vector<4x8x32xf32>
    "tpu.trace_stop"() : () -> ()
    %69 = arith.truncf %68 : vector<4x8x32xf32> to vector<4x8x32xbf16>
    %c0_24 = arith.constant 0 : index
    %c0_25 = arith.constant 0 : index
    %c0_26 = arith.constant 0 : index
    %70 = vector.load %arg10[%c0_24, %c0_25, %c0_26] : memref<4x32x128xf32, #tpu.memory_space<vmem>>, vector<4x32x128xf32>
    %71 = arith.truncf %70 : vector<4x32x128xf32> to vector<4x32x128xbf16>
    "tpu.trace_start"() <{level = 10 : i32, message = "hqd,hdm->hqm"}> : () -> ()
    %cst_27 = arith.constant dense<0.000000e+00> : vector<4x8x128xf32>
    %72 = tpu.matmul %69, %71, %cst_27 {dimension_numbers = #tpu.dot_dimension_numbers<[2], [1], [1], [2], [0, 0, 0, 1, 1, 2], [0], [0]>} : vector<4x8x32xbf16>, vector<4x32x128xbf16>, vector<4x8x128xf32> -> vector<4x8x128xf32>
    "tpu.trace_stop"() : () -> ()
    %cst_28 = arith.constant dense<0.000000e+00> : vector<8x128xf32>
    %73 = vector.multi_reduction <add>, %72, %cst_28 [0] : vector<4x8x128xf32> to vector<8x128xf32>
    %c0_29 = arith.constant 0 : index
    %c0_30 = arith.constant 0 : index
    %74 = vector.load %arg11[%c0_29, %c0_30] : memref<1x128xf32, #tpu.memory_space<vmem>>, vector<1x128xf32>
    %75 = vector.broadcast %74 : vector<1x128xf32> to vector<8x128xf32>
    %76 = arith.addf %73, %75 : vector<8x128xf32>
    %77 = arith.addf %76, %1 : vector<8x128xf32>
    %c0_31 = arith.constant 0 : index
    %c0_32 = arith.constant 0 : index
    %78 = vector.load %arg12[%c0_31, %c0_32] : memref<1x128xf32, #tpu.memory_space<vmem>>, vector<1x128xf32>
    %c0_33 = arith.constant 0 : index
    %c0_34 = arith.constant 0 : index
    %79 = vector.load %arg13[%c0_33, %c0_34] : memref<1x128xf32, #tpu.memory_space<vmem>>, vector<1x128xf32>
    %cst_35 = arith.constant dense<0.000000e+00> : vector<8xf32>
    %80 = vector.multi_reduction <add>, %77, %cst_35 [1] : vector<8x128xf32> to vector<8xf32>
    %81 = vector.shape_cast %80 : vector<8xf32> to vector<8x1xf32>
    %cst_36 = arith.constant 1.280000e+02 : f32
    %82 = vector.broadcast %cst_36 : f32 to vector<8x1xf32>
    %83 = arith.divf %81, %82 : vector<8x1xf32>
    %84 = vector.broadcast %83 : vector<8x1xf32> to vector<8x128xf32>
    %85 = arith.subf %77, %84 : vector<8x128xf32>
    %86 = arith.mulf %85, %85 : vector<8x128xf32>
    %cst_37 = arith.constant dense<0.000000e+00> : vector<8xf32>
    %87 = vector.multi_reduction <add>, %86, %cst_37 [1] : vector<8x128xf32> to vector<8xf32>
    %88 = vector.shape_cast %87 : vector<8xf32> to vector<8x1xf32>
    %cst_38 = arith.constant 1.280000e+02 : f32
    %89 = vector.broadcast %cst_38 : f32 to vector<8x1xf32>
    %90 = arith.divf %88, %89 : vector<8x1xf32>
    %91 = vector.broadcast %83 : vector<8x1xf32> to vector<8x128xf32>
    %92 = arith.subf %77, %91 : vector<8x128xf32>
    %cst_39 = arith.constant 9.99999997E-7 : f32
    %93 = vector.broadcast %cst_39 : f32 to vector<8x1xf32>
    %94 = arith.addf %90, %93 : vector<8x1xf32>
    %95 = math.rsqrt %94 : vector<8x1xf32>
    %96 = vector.broadcast %95 : vector<8x1xf32> to vector<8x128xf32>
    %97 = arith.mulf %92, %96 : vector<8x128xf32>
    %98 = vector.broadcast %78 : vector<1x128xf32> to vector<8x128xf32>
    %99 = arith.mulf %97, %98 : vector<8x128xf32>
    %100 = vector.broadcast %79 : vector<1x128xf32> to vector<8x128xf32>
    %101 = arith.addf %99, %100 : vector<8x128xf32>
    %102 = arith.truncf %101 : vector<8x128xf32> to vector<8x128xbf16>
    %c0_40 = arith.constant 0 : index
    %c0_41 = arith.constant 0 : index
    %103 = vector.load %arg14[%c0_40, %c0_41] : memref<128x256xf32, #tpu.memory_space<vmem>>, vector<128x256xf32>
    %104 = arith.truncf %103 : vector<128x256xf32> to vector<128x256xbf16>
    %cst_42 = arith.constant dense<0.000000e+00> : vector<8x256xf32>
    %105 = tpu.matmul %102, %104, %cst_42 {dimension_numbers = #tpu.dot_dimension_numbers<[1], [0], [0], [1], [0, 0, 1, 1], [], []>} : vector<8x128xbf16>, vector<128x256xbf16>, vector<8x256xf32> -> vector<8x256xf32>
    %c0_43 = arith.constant 0 : index
    %c0_44 = arith.constant 0 : index
    %106 = vector.load %arg15[%c0_43, %c0_44] : memref<1x256xf32, #tpu.memory_space<vmem>>, vector<1x256xf32>
    %107 = vector.broadcast %106 : vector<1x256xf32> to vector<8x256xf32>
    %108 = arith.addf %105, %107 : vector<8x256xf32>
    %cst_45 = arith.constant 0.000000e+00 : f32
    %109 = vector.broadcast %cst_45 : f32 to vector<8x256xf32>
    %110 = arith.maximumf %108, %109 : vector<8x256xf32>
    %111 = arith.truncf %110 : vector<8x256xf32> to vector<8x256xbf16>
    %c0_46 = arith.constant 0 : index
    %c0_47 = arith.constant 0 : index
    %112 = vector.load %arg16[%c0_46, %c0_47] : memref<256x128xf32, #tpu.memory_space<vmem>>, vector<256x128xf32>
    %113 = arith.truncf %112 : vector<256x128xf32> to vector<256x128xbf16>
    %cst_48 = arith.constant dense<0.000000e+00> : vector<8x128xf32>
    %114 = tpu.matmul %111, %113, %cst_48 {dimension_numbers = #tpu.dot_dimension_numbers<[1], [0], [0], [1], [0, 0, 1, 1], [], []>} : vector<8x256xbf16>, vector<256x128xbf16>, vector<8x128xf32> -> vector<8x128xf32>
    %c0_49 = arith.constant 0 : index
    %c0_50 = arith.constant 0 : index
    %115 = vector.load %arg17[%c0_49, %c0_50] : memref<1x128xf32, #tpu.memory_space<vmem>>, vector<1x128xf32>
    %116 = vector.broadcast %115 : vector<1x128xf32> to vector<8x128xf32>
    %117 = arith.addf %114, %116 : vector<8x128xf32>
    %118 = arith.addf %117, %101 : vector<8x128xf32>
    %c0_51 = arith.constant 0 : index
    %c0_52 = arith.constant 0 : index
    %119 = vector.load %arg18[%c0_51, %c0_52] : memref<1x128xf32, #tpu.memory_space<vmem>>, vector<1x128xf32>
    %c0_53 = arith.constant 0 : index
    %c0_54 = arith.constant 0 : index
    %120 = vector.load %arg19[%c0_53, %c0_54] : memref<1x128xf32, #tpu.memory_space<vmem>>, vector<1x128xf32>
    %cst_55 = arith.constant dense<0.000000e+00> : vector<8xf32>
    %121 = vector.multi_reduction <add>, %118, %cst_55 [1] : vector<8x128xf32> to vector<8xf32>
    %122 = vector.shape_cast %121 : vector<8xf32> to vector<8x1xf32>
    %cst_56 = arith.constant 1.280000e+02 : f32
    %123 = vector.broadcast %cst_56 : f32 to vector<8x1xf32>
    %124 = arith.divf %122, %123 : vector<8x1xf32>
    %125 = vector.broadcast %124 : vector<8x1xf32> to vector<8x128xf32>
    %126 = arith.subf %118, %125 : vector<8x128xf32>
    %127 = arith.mulf %126, %126 : vector<8x128xf32>
    %cst_57 = arith.constant dense<0.000000e+00> : vector<8xf32>
    %128 = vector.multi_reduction <add>, %127, %cst_57 [1] : vector<8x128xf32> to vector<8xf32>
    %129 = vector.shape_cast %128 : vector<8xf32> to vector<8x1xf32>
    %cst_58 = arith.constant 1.280000e+02 : f32
    %130 = vector.broadcast %cst_58 : f32 to vector<8x1xf32>
    %131 = arith.divf %129, %130 : vector<8x1xf32>
    %132 = vector.broadcast %124 : vector<8x1xf32> to vector<8x128xf32>
    %133 = arith.subf %118, %132 : vector<8x128xf32>
    %cst_59 = arith.constant 9.99999997E-7 : f32
    %134 = vector.broadcast %cst_59 : f32 to vector<8x1xf32>
    %135 = arith.addf %131, %134 : vector<8x1xf32>
    %136 = math.rsqrt %135 : vector<8x1xf32>
    %137 = vector.broadcast %136 : vector<8x1xf32> to vector<8x128xf32>
    %138 = arith.mulf %133, %137 : vector<8x128xf32>
    %139 = vector.broadcast %119 : vector<1x128xf32> to vector<8x128xf32>
    %140 = arith.mulf %138, %139 : vector<8x128xf32>
    %141 = vector.broadcast %120 : vector<1x128xf32> to vector<8x128xf32>
    %142 = arith.addf %140, %141 : vector<8x128xf32>
    %c0_60 = arith.constant 0 : index
    %c0_61 = arith.constant 0 : index
    %c0_62 = arith.constant 0 : index
    %143 = vector.load %arg20[%c0_60, %c0_61, %c0_62] : memref<1x8x128xf32, #tpu.memory_space<vmem>>, vector<1x8x128xf32>
    %144 = vector.shape_cast %143 : vector<1x8x128xf32> to vector<8x128xf32>
    %145 = vector.shape_cast %142 : vector<8x128xf32> to vector<1x8x128xf32>
    tpu.vector_store %arg20[%c0_60, %c0_61, %c0_62], %145 {strides = array<i32>} : memref<1x8x128xf32, #tpu.memory_space<vmem>>, vector<1x8x128xf32>,
    return
  }
  func.func @transform_0(%arg0: i32, %arg1: i32) -> (i32, i32, i32) {
    %c0_i32 = arith.constant 0 : i32
    %c0_i32_0 = arith.constant 0 : i32
    return %arg0, %arg1, %c0_i32 : i32, i32, i32
  }
  func.func @transform_1(%arg0: i32, %arg1: i32) -> (i32, i32, i32) {
    %c0_i32 = arith.constant 0 : i32
    %c0_i32_0 = arith.constant 0 : i32
    %c0_i32_1 = arith.constant 0 : i32
    return %arg0, %c0_i32, %c0_i32_0 : i32, i32, i32
  }
  func.func @transform_2(%arg0: i32, %arg1: i32) -> (i32, i32) {
    %c0_i32 = arith.constant 0 : i32
    %c0_i32_0 = arith.constant 0 : i32
    %c0_i32_1 = arith.constant 0 : i32
    return %c0_i32, %c0_i32_0 : i32, i32
  }
  func.func @transform_3(%arg0: i32, %arg1: i32) -> (i32, i32) {
    %c0_i32 = arith.constant 0 : i32
    %c0_i32_0 = arith.constant 0 : i32
    %c0_i32_1 = arith.constant 0 : i32
    return %c0_i32, %c0_i32_0 : i32, i32
  }
  func.func @transform_4(%arg0: i32, %arg1: i32) -> (i32, i32) {
    %c0_i32 = arith.constant 0 : i32
    %c0_i32_0 = arith.constant 0 : i32
    %c0_i32_1 = arith.constant 0 : i32
    return %c0_i32, %c0_i32_0 : i32, i32
  }
  func.func @transform_5(%arg0: i32, %arg1: i32) -> (i32, i32) {
    %c0_i32 = arith.constant 0 : i32
    %c0_i32_0 = arith.constant 0 : i32
    %c0_i32_1 = arith.constant 0 : i32
    return %c0_i32, %c0_i32_0 : i32, i32
  }
  func.func @transform_6(%arg0: i32, %arg1: i32) -> (i32, i32) {
    %c0_i32 = arith.constant 0 : i32
    %c0_i32_0 = arith.constant 0 : i32
    %c0_i32_1 = arith.constant 0 : i32
    return %c0_i32, %c0_i32_0 : i32, i32
  }
  func.func @transform_7(%arg0: i32, %arg1: i32) -> (i32, i32) {
    %c0_i32 = arith.constant 0 : i32
    %c0_i32_0 = arith.constant 0 : i32
    %c0_i32_1 = arith.constant 0 : i32
    return %c0_i32, %c0_i32_0 : i32, i32
  }
  func.func @transform_8(%arg0: i32, %arg1: i32) -> (i32, i32, i32) {
    %c0_i32 = arith.constant 0 : i32
    %c0_i32_0 = arith.constant 0 : i32
    %c0_i32_1 = arith.constant 0 : i32
    %c0_i32_2 = arith.constant 0 : i32
    return %c0_i32, %c0_i32_0, %c0_i32_1 : i32, i32, i32
  }
  func.func @transform_9(%arg0: i32, %arg1: i32) -> (i32, i32) {
    %c0_i32 = arith.constant 0 : i32
    %c0_i32_0 = arith.constant 0 : i32
    %c0_i32_1 = arith.constant 0 : i32
    return %c0_i32, %c0_i32_0 : i32, i32
  }
  func.func @transform_10(%arg0: i32, %arg1: i32) -> (i32, i32) {
    %c0_i32 = arith.constant 0 : i32
    %c0_i32_0 = arith.constant 0 : i32
    %c0_i32_1 = arith.constant 0 : i32
    return %c0_i32, %c0_i32_0 : i32, i32
  }
  func.func @transform_11(%arg0: i32, %arg1: i32) -> (i32, i32) {
    %c0_i32 = arith.constant 0 : i32
    %c0_i32_0 = arith.constant 0 : i32
    %c0_i32_1 = arith.constant 0 : i32
    return %c0_i32, %c0_i32_0 : i32, i32
  }
  func.func @transform_12(%arg0: i32, %arg1: i32) -> (i32, i32) {
    %c0_i32 = arith.constant 0 : i32
    %c0_i32_0 = arith.constant 0 : i32
    %c0_i32_1 = arith.constant 0 : i32
    return %c0_i32, %c0_i32_0 : i32, i32
  }
  func.func @transform_13(%arg0: i32, %arg1: i32) -> (i32, i32) {
    %c0_i32 = arith.constant 0 : i32
    %c0_i32_0 = arith.constant 0 : i32
    %c0_i32_1 = arith.constant 0 : i32
    return %c0_i32, %c0_i32_0 : i32, i32
  }
  func.func @transform_14(%arg0: i32, %arg1: i32) -> (i32, i32) {
    %c0_i32 = arith.constant 0 : i32
    %c0_i32_0 = arith.constant 0 : i32
    %c0_i32_1 = arith.constant 0 : i32
    return %c0_i32, %c0_i32_0 : i32, i32
  }
  func.func @transform_15(%arg0: i32, %arg1: i32) -> (i32, i32) {
    %c0_i32 = arith.constant 0 : i32
    %c0_i32_0 = arith.constant 0 : i32
    %c0_i32_1 = arith.constant 0 : i32
    return %c0_i32, %c0_i32_0 : i32, i32
  }
  func.func @transform_16(%arg0: i32, %arg1: i32) -> (i32, i32) {
    %c0_i32 = arith.constant 0 : i32
    %c0_i32_0 = arith.constant 0 : i32
    %c0_i32_1 = arith.constant 0 : i32
    return %c0_i32, %c0_i32_0 : i32, i32
  }
  func.func @transform_17(%arg0: i32, %arg1: i32) -> (i32, i32) {
    %c0_i32 = arith.constant 0 : i32
    %c0_i32_0 = arith.constant 0 : i32
    %c0_i32_1 = arith.constant 0 : i32
    return %c0_i32, %c0_i32_0 : i32, i32
  }
  func.func @transform_18(%arg0: i32, %arg1: i32) -> (i32, i32, i32) {
    %c0_i32 = arith.constant 0 : i32
    %c0_i32_0 = arith.constant 0 : i32
    return %arg0, %arg1, %c0_i32 : i32, i32, i32
  }
}

</mosaic_0001>

<llo_original>
// kernel: tpu_custom_call.1
$region0: #{tpu_custom_call.1}
  #allocation0 [shape = 'u32[]', space=smem, size = 0x4, offset = 0x4, fixed_abs, tag = 'smem constant byte address 0x4 - core index']
  #allocation1 [shape = 'u32[144,128]{1,0:T(1,128)}', space=vmem, size = 0x12000, scoped, tag = 'internal scratch']
  %s0 = inlined_call_operand.hbm [shape: f32[2,8,128], index: 0, kind: input, shape index: {}]
  %s1 = inlined_call_operand.hbm [shape: f32[2,8,128], index: 1, kind: input, shape index: {}]
  %s2 = inlined_call_operand.hbm [shape: f32[128,128], index: 2, kind: input, shape index: {}]
  %s3 = inlined_call_operand.hbm [shape: f32[1,128], index: 3, kind: input, shape index: {}]
  %s4 = inlined_call_operand.hbm [shape: f32[128,128], index: 4, kind: input, shape index: {}]
  %s5 = inlined_call_operand.hbm [shape: f32[1,128], index: 5, kind: input, shape index: {}]
  %s6 = inlined_call_operand.hbm [shape: f32[128,128], index: 6, kind: input, shape index: {}]
  %s7 = inlined_call_operand.hbm [shape: f32[1,128], index: 7, kind: input, shape index: {}]
  %s8 = inlined_call_operand.hbm [shape: f32[4,32,128], index: 8, kind: input, shape index: {}]
  %s9 = inlined_call_operand.hbm [shape: f32[1,128], index: 9, kind: input, shape index: {}]
  %s10 = inlined_call_operand.hbm [shape: f32[1,128], index: 10, kind: input, shape index: {}]
  %s11 = inlined_call_operand.hbm [shape: f32[1,128], index: 11, kind: input, shape index: {}]
  %s12 = inlined_call_operand.hbm [shape: f32[128,256], index: 12, kind: input, shape index: {}]
  %s13 = inlined_call_operand.hbm [shape: f32[1,256], index: 13, kind: input, shape index: {}]
  %s14 = inlined_call_operand.hbm [shape: f32[256,128], index: 14, kind: input, shape index: {}]
  %s15 = inlined_call_operand.hbm [shape: f32[1,128], index: 15, kind: input, shape index: {}]
  %s16 = inlined_call_operand.hbm [shape: f32[1,128], index: 16, kind: input, shape index: {}]
  %s17 = inlined_call_operand.hbm [shape: f32[1,128], index: 17, kind: input, shape index: {}]
  %s18 = inlined_call_operand.hbm [shape: f32[2,8,128], index: 18, kind: output, shape index: {}]
  %s19 = sld [smem:[#allocation0]]
  $region177: #{tpu_custom_call.1} parent=0
    _
  %s21 = ssub.s32 1, %s19
  %s22 = scalar_select 0, %s21, %s19
  $region1: #{tpu_custom_call.1} parent=0
    #allocation2 [shape = 'u8[8192]{0}', space=vmem, size = 0x2000, scoped, tag = 'input window, operand 0']
    #allocation3 [shape = 's32[2]{0}', space=sflag, size = 0x8, scoped, tag = 'scoped memory for tpu_custom_call.1']
    #allocation4 [shape = 's32[2]{0}', space=sflag, size = 0x8, scoped, tag = 'scoped memory for tpu_custom_call.1']
    #allocation5 [shape = 'u8[8192]{0}', space=vmem, size = 0x2000, scoped, tag = 'input window, operand 1']
    #allocation6 [shape = 's32[2]{0}', space=sflag, size = 0x8, scoped, tag = 'scoped memory for tpu_custom_call.1']
    #allocation7 [shape = 'u8[65536]{0}', space=vmem, size = 0x10000, scoped, tag = 'input window, operand 2, single buffered']
    #allocation8 [shape = 'u8[512]{0}', space=vmem, size = 0x400, scoped, tag = 'input window, operand 3, single buffered']
    #allocation9 [shape = 's32[1]{0}', space=sflag, size = 0x4, scoped, tag = 'scoped memory for tpu_custom_call.1']
    #allocation10 [shape = 'u8[65536]{0}', space=vmem, size = 0x10000, scoped, tag = 'input window, operand 4, single buffered']
    #allocation11 [shape = 'u8[512]{0}', space=vmem, size = 0x400, scoped, tag = 'input window, operand 5, single buffered']
    #allocation12 [shape = 's32[1]{0}', space=sflag, size = 0x4, scoped, tag = 'scoped memory for tpu_custom_call.1']
    #allocation13 [shape = 'u8[65536]{0}', space=vmem, size = 0x10000, scoped, tag = 'input window, operand 6, single buffered']
    #allocation14 [shape = 'u8[512]{0}', space=vmem, size = 0x400, scoped, tag = 'input window, operand 7, single buffered']
    #allocation15 [shape = 's32[1]{0}', space=sflag, size = 0x4, scoped, tag = 'scoped memory for tpu_custom_call.1']
    #allocation16 [shape = 'u8[65536]{0}', space=vmem, size = 0x10000, scoped, tag = 'input window, operand 8, single buffered']
    #allocation17 [shape = 'u8[512]{0}', space=vmem, size = 0x400, scoped, tag = 'input window, operand 9, single buffered']
    #allocation18 [shape = 's32[1]{0}', space=sflag, size = 0x4, scoped, tag = 'scoped memory for tpu_custom_call.1']
    #allocation19 [shape = 'u8[512]{0}', space=vmem, size = 0x400, scoped, tag = 'input window, operand 10, single buffered']
    #allocation20 [shape = 'u8[512]{0}', space=vmem, size = 0x400, scoped, tag = 'input window, operand 11, single buffered']
    #allocation21 [shape = 's32[1]{0}', space=sflag, size = 0x4, scoped, tag = 'scoped memory for tpu_custom_call.1']
    #allocation22 [shape = 'u8[131072]{0}', space=vmem, size = 0x20000, scoped, tag = 'input window, operand 12, single buffered']
    #allocation23 [shape = 'u8[1024]{0}', space=vmem, size = 0x400, scoped, tag = 'input window, operand 13, single buffered']
    #allocation24 [shape = 's32[1]{0}', space=sflag, size = 0x4, scoped, tag = 'scoped memory for tpu_custom_call.1']
    #allocation25 [shape = 'u8[131072]{0}', space=vmem, size = 0x20000, scoped, tag = 'input window, operand 14, single buffered']
    #allocation26 [shape = 'u8[512]{0}', space=vmem, size = 0x400, scoped, tag = 'input window, operand 15, single buffered']
    #allocation27 [shape = 's32[1]{0}', space=sflag, size = 0x4, scoped, tag = 'scoped memory for tpu_custom_call.1']
    #allocation28 [shape = 'u8[512]{0}', space=vmem, size = 0x400, scoped, tag = 'input window, operand 16, single buffered']
    #allocation29 [shape = 'u8[512]{0}', space=vmem, size = 0x400, scoped, tag = 'input window, operand 17, single buffered']
    #allocation30 [shape = 's32[1]{0}', space=sflag, size = 0x4, scoped, tag = 'scoped memory for tpu_custom_call.1']
    #allocation31 [shape = 'u8[8192]{0}', space=vmem, size = 0x2000, scoped, tag = 'output window, operand 0']
    %23 = vsyncpa [#allocation3], 0
    %s24 = scalar_lea.sflag [#allocation3], 1
    %25 = vsyncpa %s24, 0
    %26 = vsyncpa [#allocation6], 0
    %s27 = scalar_lea.sflag [#allocation6], 1
    %28 = vsyncpa %s27, 0
    %29 = vsyncpa [#allocation9], 0
    %30 = vsyncpa [#allocation12], 0
    %31 = vsyncpa [#allocation15], 0
    %32 = vsyncpa [#allocation18], 0
    %33 = vsyncpa [#allocation21], 0
    %34 = vsyncpa [#allocation24], 0
    %35 = vsyncpa [#allocation27], 0
    %36 = vsyncpa [#allocation30], 0
    %37 = vsyncpa [#allocation4], 0
    %s38 = scalar_lea.sflag [#allocation4], 1
    %39 = vsyncpa %s38, 0
    loop: start=0, step=1, limit=4
    $region2: #{tpu_custom_call.1} parent=1 // loop_pre_header
      _
    $region3: #{tpu_custom_call.1} parent=1 // loop_header
      %s41 = sphi 0, %s45
      %p42 = scmp.ge.s32.totalorder %s41, 4
      %s48 = sphi 0, %s60
      %s49 = sphi 0, %s56
      %s50 = sphi 0, %s48
      %s51 = sphi 0, %s49
      %s52 = sphi 0, %s50
      %s53 = sphi 0, %s51
      %s65 = sphi 0, %s67
      %s68 = sphi 0, %s65
      %s69 = sphi 0, %s68
      %s85 = sphi 0, %s69
      %s91 = sphi 0, %s93
      %s94 = sphi 0, %s91
      %s95 = sphi 0, %s94
      %s111 = sphi 0, %s95
      %s115 = sphi 0, %s115
      %s117 = sphi 0, %s115
      %s118 = sphi 0, %s117
      %s132 = sphi 0, %s118
      %s136 = sphi 0, %s136
      %s138 = sphi 0, %s136
      %s139 = sphi 0, %s138
      %s153 = sphi 0, %s139
      %s157 = sphi 0, %s157
      %s159 = sphi 0, %s157
      %s160 = sphi 0, %s159
      %s174 = sphi 0, %s160
      %s178 = sphi 0, %s178
      %s180 = sphi 0, %s178
      %s181 = sphi 0, %s180
      %s195 = sphi 0, %s181
      %s199 = sphi 0, %s199
      %s201 = sphi 0, %s199
      %s202 = sphi 0, %s201
      %s216 = sphi 0, %s202
      %s220 = sphi 0, %s220
      %s222 = sphi 0, %s220
      %s223 = sphi 0, %s222
      %s237 = sphi 0, %s223
      %s241 = sphi 0, %s241
      %s243 = sphi 0, %s241
      %s244 = sphi 0, %s243
      %s258 = sphi 0, %s244
      %s262 = sphi 0, %s262
      %s264 = sphi 0, %s262
      %s265 = sphi 0, %s264
      %s279 = sphi 0, %s265
      %s283 = sphi 0, %s283
      %s285 = sphi 0, %s283
      %s286 = sphi 0, %s285
      %s300 = sphi 0, %s286
      %s304 = sphi 0, %s304
      %s306 = sphi 0, %s304
      %s307 = sphi 0, %s306
      %s321 = sphi 0, %s307
      %s325 = sphi 0, %s325
      %s327 = sphi 0, %s325
      %s328 = sphi 0, %s327
      %s342 = sphi 0, %s328
      %s346 = sphi 0, %s346
      %s348 = sphi 0, %s346
      %s349 = sphi 0, %s348
      %s363 = sphi 0, %s349
      %s367 = sphi 0, %s367
      %s369 = sphi 0, %s367
      %s370 = sphi 0, %s369
      %s384 = sphi 0, %s370
      %s388 = sphi 0, %s388
      %s390 = sphi 0, %s388
      %s391 = sphi 0, %s390
      %s405 = sphi 0, %s391
      %s409 = sphi 0, %s409
      %s411 = sphi 0, %s409
      %s412 = sphi 0, %s411
      %s426 = sphi 0, %s412
      %s430 = sphi 0, %s430
      %s432 = sphi 0, %s430
      %s433 = sphi 0, %s432
      %s447 = sphi 0, %s433
      %s455 = sphi 0, %s457
      %s458 = sphi 0, %s455
      %s459 = sphi 0, %s458
      %s475 = sphi 0, %s459
    $region4: #{tpu_custom_call.1} parent=1 // loop_header_branch
      %44 = sbr.rel (%p42) target = $region8
    $region5: #{tpu_custom_call.1} parent=1 // loop_body
      %s46 = ssub.s32 %s41, 1
      %s47 = ssub.s32 %s41, 2
      %s54 = sadd.s32 1, %s49
      %p55 = scmp.ge.s32.totalorder %s54, 1
      %s56 = scalar_select %p55, 0, %s54
      %s57 = sadd.s32 1, %s48
      %s58 = scalar_select %p55, %s57, %s48
      %p59 = scmp.ge.s32.totalorder %s58, 2
      %s60 = scalar_select %p59, 0, %s58
      %s61 = ssub.s32 %s48, %s60
      %s62 = ssub.s32 %s49, %s56
      %s63 = sor.u32 %s61, %s62
      %p64 = scmp.eq.s32.totalorder %s63, 0
      %s66 = sadd.s32 %s65, 1
      %s67 = scalar_select %p64, %s65, %s66
      %p70 = pneg %p64
      %p71 = scmp.eq.s32.totalorder %s41, 1
      %p72 = por %p70, %p71
      %p73 = scmp.ne.s32.totalorder %s65, %s68
      %p74 = scmp.eq.s32.totalorder %s41, 0
      %p75 = por %p73, %p74
      %p76 = scmp.ne.s32.totalorder %s65, %s68
      %p77 = scmp.eq.s32.totalorder %s46, 1
      %p78 = por %p76, %p77
      %p79 = scmp.ne.s32.totalorder %s68, %s69
      %p80 = scmp.eq.s32.totalorder %s46, 0
      %p81 = por %p79, %p80
      %p82 = scmp.ne.s32.totalorder %s68, %s69
      %p83 = scmp.eq.s32.totalorder %s47, 1
      %p84 = por %p82, %p83
      %p86 = scmp.ne.s32.totalorder %s69, %s85
      %p87 = scmp.eq.s32.totalorder %s47, 0
      %p88 = por %p86, %p87
      %s89 = ssub.s32 %s48, %s60
      %p90 = scmp.eq.s32.totalorder %s89, 0
      %s92 = sadd.s32 %s91, 1
      %s93 = scalar_select %p90, %s91, %s92
      %p96 = pneg %p90
      %p97 = scmp.eq.s32.totalorder %s41, 1
      %p98 = por %p96, %p97
      %p99 = scmp.ne.s32.totalorder %s91, %s94
      %p100 = scmp.eq.s32.totalorder %s41, 0
      %p101 = por %p99, %p100
      %p102 = scmp.ne.s32.totalorder %s91, %s94
      %p103 = scmp.eq.s32.totalorder %s46, 1
      %p104 = por %p102, %p103
      %p105 = scmp.ne.s32.totalorder %s94, %s95
      %p106 = scmp.eq.s32.totalorder %s46, 0
      %p107 = por %p105, %p106
      %p108 = scmp.ne.s32.totalorder %s94, %s95
      %p109 = scmp.eq.s32.totalorder %s47, 1
      %p110 = por %p108, %p109
      %p112 = scmp.ne.s32.totalorder %s95, %s111
      %p113 = scmp.eq.s32.totalorder %s47, 0
      %p114 = por %p112, %p113
      %s116 = sadd.s32 %s115, 1
      %p119 = scmp.eq.s32.totalorder %s41, 1
      %p120 = scmp.ne.s32.totalorder %s115, %s117
      %p121 = scmp.eq.s32.totalorder %s41, 0
      %p122 = por %p120, %p121
      %p123 = scmp.ne.s32.totalorder %s115, %s117
      %p124 = scmp.eq.s32.totalorder %s46, 1
      %p125 = por %p123, %p124
      %p126 = scmp.ne.s32.totalorder %s117, %s118
      %p127 = scmp.eq.s32.totalorder %s46, 0
      %p128 = por %p126, %p127
      %p129 = scmp.ne.s32.totalorder %s117, %s118
      %p130 = scmp.eq.s32.totalorder %s47, 1
      %p131 = por %p129, %p130
      %p133 = scmp.ne.s32.totalorder %s118, %s132
      %p134 = scmp.eq.s32.totalorder %s47, 0
      %p135 = por %p133, %p134
      %s137 = sadd.s32 %s136, 1
      %p140 = scmp.eq.s32.totalorder %s41, 1
      %p141 = scmp.ne.s32.totalorder %s136, %s138
      %p142 = scmp.eq.s32.totalorder %s41, 0
      %p143 = por %p141, %p142
      %p144 = scmp.ne.s32.totalorder %s136, %s138
      %p145 = scmp.eq.s32.totalorder %s46, 1
      %p146 = por %p144, %p145
      %p147 = scmp.ne.s32.totalorder %s138, %s139
      %p148 = scmp.eq.s32.totalorder %s46, 0
      %p149 = por %p147, %p148
      %p150 = scmp.ne.s32.totalorder %s138, %s139
      %p151 = scmp.eq.s32.totalorder %s47, 1
      %p152 = por %p150, %p151
      %p154 = scmp.ne.s32.totalorder %s139, %s153
      %p155 = scmp.eq.s32.totalorder %s47, 0
      %p156 = por %p154, %p155
      %s158 = sadd.s32 %s157, 1
      %p161 = scmp.eq.s32.totalorder %s41, 1
      %p162 = scmp.ne.s32.totalorder %s157, %s159
      %p163 = scmp.eq.s32.totalorder %s41, 0
      %p164 = por %p162, %p163
      %p165 = scmp.ne.s32.totalorder %s157, %s159
      %p166 = scmp.eq.s32.totalorder %s46, 1
      %p167 = por %p165, %p166
      %p168 = scmp.ne.s32.totalorder %s159, %s160
      %p169 = scmp.eq.s32.totalorder %s46, 0
      %p170 = por %p168, %p169
      %p171 = scmp.ne.s32.totalorder %s159, %s160
      %p172 = scmp.eq.s32.totalorder %s47, 1
      %p173 = por %p171, %p172
      %p175 = scmp.ne.s32.totalorder %s160, %s174
      %p176 = scmp.eq.s32.totalorder %s47, 0
      %p177 = por %p175, %p176
      %s179 = sadd.s32 %s178, 1
      %p182 = scmp.eq.s32.totalorder %s41, 1
      %p183 = scmp.ne.s32.totalorder %s178, %s180
      %p184 = scmp.eq.s32.totalorder %s41, 0
      %p185 = por %p183, %p184
      %p186 = scmp.ne.s32.totalorder %s178, %s180
      %p187 = scmp.eq.s32.totalorder %s46, 1
      %p188 = por %p186, %p187
      %p189 = scmp.ne.s32.totalorder %s180, %s181
      %p190 = scmp.eq.s32.totalorder %s46, 0
      %p191 = por %p189, %p190
      %p192 = scmp.ne.s32.totalorder %s180, %s181
      %p193 = scmp.eq.s32.totalorder %s47, 1
      %p194 = por %p192, %p193
      %p196 = scmp.ne.s32.totalorder %s181, %s195
      %p197 = scmp.eq.s32.totalorder %s47, 0
      %p198 = por %p196, %p197
      %s200 = sadd.s32 %s199, 1
      %p203 = scmp.eq.s32.totalorder %s41, 1
      %p204 = scmp.ne.s32.totalorder %s199, %s201
      %p205 = scmp.eq.s32.totalorder %s41, 0
      %p206 = por %p204, %p205
      %p207 = scmp.ne.s32.totalorder %s199, %s201
      %p208 = scmp.eq.s32.totalorder %s46, 1
      %p209 = por %p207, %p208
      %p210 = scmp.ne.s32.totalorder %s201, %s202
      %p211 = scmp.eq.s32.totalorder %s46, 0
      %p212 = por %p210, %p211
      %p213 = scmp.ne.s32.totalorder %s201, %s202
      %p214 = scmp.eq.s32.totalorder %s47, 1
      %p215 = por %p213, %p214
      %p217 = scmp.ne.s32.totalorder %s202, %s216
      %p218 = scmp.eq.s32.totalorder %s47, 0
      %p219 = por %p217, %p218
      %s221 = sadd.s32 %s220, 1
      %p224 = scmp.eq.s32.totalorder %s41, 1
      %p225 = scmp.ne.s32.totalorder %s220, %s222
      %p226 = scmp.eq.s32.totalorder %s41, 0
      %p227 = por %p225, %p226
      %p228 = scmp.ne.s32.totalorder %s220, %s222
      %p229 = scmp.eq.s32.totalorder %s46, 1
      %p230 = por %p228, %p229
      %p231 = scmp.ne.s32.totalorder %s222, %s223
      %p232 = scmp.eq.s32.totalorder %s46, 0
      %p233 = por %p231, %p232
      %p234 = scmp.ne.s32.totalorder %s222, %s223
      %p235 = scmp.eq.s32.totalorder %s47, 1
      %p236 = por %p234, %p235
      %p238 = scmp.ne.s32.totalorder %s223, %s237
      %p239 = scmp.eq.s32.totalorder %s47, 0
      %p240 = por %p238, %p239
      %s242 = sadd.s32 %s241, 1
      %p245 = scmp.eq.s32.totalorder %s41, 1
      %p246 = scmp.ne.s32.totalorder %s241, %s243
      %p247 = scmp.eq.s32.totalorder %s41, 0
      %p248 = por %p246, %p247
      %p249 = scmp.ne.s32.totalorder %s241, %s243
      %p250 = scmp.eq.s32.totalorder %s46, 1
      %p251 = por %p249, %p250
      %p252 = scmp.ne.s32.totalorder %s243, %s244
      %p253 = scmp.eq.s32.totalorder %s46, 0
      %p254 = por %p252, %p253
      %p255 = scmp.ne.s32.totalorder %s243, %s244
      %p256 = scmp.eq.s32.totalorder %s47, 1
      %p257 = por %p255, %p256
      %p259 = scmp.ne.s32.totalorder %s244, %s258
      %p260 = scmp.eq.s32.totalorder %s47, 0
      %p261 = por %p259, %p260
      %s263 = sadd.s32 %s262, 1
      %p266 = scmp.eq.s32.totalorder %s41, 1
      %p267 = scmp.ne.s32.totalorder %s262, %s264
      %p268 = scmp.eq.s32.totalorder %s41, 0
      %p269 = por %p267, %p268
      %p270 = scmp.ne.s32.totalorder %s262, %s264
      %p271 = scmp.eq.s32.totalorder %s46, 1
      %p272 = por %p270, %p271
      %p273 = scmp.ne.s32.totalorder %s264, %s265
      %p274 = scmp.eq.s32.totalorder %s46, 0
      %p275 = por %p273, %p274
      %p276 = scmp.ne.s32.totalorder %s264, %s265
      %p277 = scmp.eq.s32.totalorder %s47, 1
      %p278 = por %p276, %p277
      %p280 = scmp.ne.s32.totalorder %s265, %s279
      %p281 = scmp.eq.s32.totalorder %s47, 0
      %p282 = por %p280, %p281
      %s284 = sadd.s32 %s283, 1
      %p287 = scmp.eq.s32.totalorder %s41, 1
      %p288 = scmp.ne.s32.totalorder %s283, %s285
      %p289 = scmp.eq.s32.totalorder %s41, 0
      %p290 = por %p288, %p289
      %p291 = scmp.ne.s32.totalorder %s283, %s285
      %p292 = scmp.eq.s32.totalorder %s46, 1
      %p293 = por %p291, %p292
      %p294 = scmp.ne.s32.totalorder %s285, %s286
      %p295 = scmp.eq.s32.totalorder %s46, 0
      %p296 = por %p294, %p295
      %p297 = scmp.ne.s32.totalorder %s285, %s286
      %p298 = scmp.eq.s32.totalorder %s47, 1
      %p299 = por %p297, %p298
      %p301 = scmp.ne.s32.totalorder %s286, %s300
      %p302 = scmp.eq.s32.totalorder %s47, 0
      %p303 = por %p301, %p302
      %s305 = sadd.s32 %s304, 1
      %p308 = scmp.eq.s32.totalorder %s41, 1
      %p309 = scmp.ne.s32.totalorder %s304, %s306
      %p310 = scmp.eq.s32.totalorder %s41, 0
      %p311 = por %p309, %p310
      %p312 = scmp.ne.s32.totalorder %s304, %s306
      %p313 = scmp.eq.s32.totalorder %s46, 1
      %p314 = por %p312, %p313
      %p315 = scmp.ne.s32.totalorder %s306, %s307
      %p316 = scmp.eq.s32.totalorder %s46, 0
      %p317 = por %p315, %p316
      %p318 = scmp.ne.s32.totalorder %s306, %s307
      %p319 = scmp.eq.s32.totalorder %s47, 1
      %p320 = por %p318, %p319
      %p322 = scmp.ne.s32.totalorder %s307, %s321
      %p323 = scmp.eq.s32.totalorder %s47, 0
      %p324 = por %p322, %p323
      %s326 = sadd.s32 %s325, 1
      %p329 = scmp.eq.s32.totalorder %s41, 1
      %p330 = scmp.ne.s32.totalorder %s325, %s327
      %p331 = scmp.eq.s32.totalorder %s41, 0
      %p332 = por %p330, %p331
      %p333 = scmp.ne.s32.totalorder %s325, %s327
      %p334 = scmp.eq.s32.totalorder %s46, 1
      %p335 = por %p333, %p334
      %p336 = scmp.ne.s32.totalorder %s327, %s328
      %p337 = scmp.eq.s32.totalorder %s46, 0
      %p338 = por %p336, %p337
      %p339 = scmp.ne.s32.totalorder %s327, %s328
      %p340 = scmp.eq.s32.totalorder %s47, 1
      %p341 = por %p339, %p340
      %p343 = scmp.ne.s32.totalorder %s328, %s342
      %p344 = scmp.eq.s32.totalorder %s47, 0
      %p345 = por %p343, %p344
      %s347 = sadd.s32 %s346, 1
      %p350 = scmp.eq.s32.totalorder %s41, 1
      %p351 = scmp.ne.s32.totalorder %s346, %s348
      %p352 = scmp.eq.s32.totalorder %s41, 0
      %p353 = por %p351, %p352
      %p354 = scmp.ne.s32.totalorder %s346, %s348
      %p355 = scmp.eq.s32.totalorder %s46, 1
      %p356 = por %p354, %p355
      %p357 = scmp.ne.s32.totalorder %s348, %s349
      %p358 = scmp.eq.s32.totalorder %s46, 0
      %p359 = por %p357, %p358
      %p360 = scmp.ne.s32.totalorder %s348, %s349
      %p361 = scmp.eq.s32.totalorder %s47, 1
      %p362 = por %p360, %p361
      %p364 = scmp.ne.s32.totalorder %s349, %s363
      %p365 = scmp.eq.s32.totalorder %s47, 0
      %p366 = por %p364, %p365
      %s368 = sadd.s32 %s367, 1
      %p371 = scmp.eq.s32.totalorder %s41, 1
      %p372 = scmp.ne.s32.totalorder %s367, %s369
      %p373 = scmp.eq.s32.totalorder %s41, 0
      %p374 = por %p372, %p373
      %p375 = scmp.ne.s32.totalorder %s367, %s369
      %p376 = scmp.eq.s32.totalorder %s46, 1
      %p377 = por %p375, %p376
      %p378 = scmp.ne.s32.totalorder %s369, %s370
      %p379 = scmp.eq.s32.totalorder %s46, 0
      %p380 = por %p378, %p379
      %p381 = scmp.ne.s32.totalorder %s369, %s370
      %p382 = scmp.eq.s32.totalorder %s47, 1
      %p383 = por %p381, %p382
      %p385 = scmp.ne.s32.totalorder %s370, %s384
      %p386 = scmp.eq.s32.totalorder %s47, 0
      %p387 = por %p385, %p386
      %s389 = sadd.s32 %s388, 1
      %p392 = scmp.eq.s32.totalorder %s41, 1
      %p393 = scmp.ne.s32.totalorder %s388, %s390
      %p394 = scmp.eq.s32.totalorder %s41, 0
      %p395 = por %p393, %p394
      %p396 = scmp.ne.s32.totalorder %s388, %s390
      %p397 = scmp.eq.s32.totalorder %s46, 1
      %p398 = por %p396, %p397
      %p399 = scmp.ne.s32.totalorder %s390, %s391
      %p400 = scmp.eq.s32.totalorder %s46, 0
      %p401 = por %p399, %p400
      %p402 = scmp.ne.s32.totalorder %s390, %s391
      %p403 = scmp.eq.s32.totalorder %s47, 1
      %p404 = por %p402, %p403
      %p406 = scmp.ne.s32.totalorder %s391, %s405
      %p407 = scmp.eq.s32.totalorder %s47, 0
      %p408 = por %p406, %p407
      %s410 = sadd.s32 %s409, 1
      %p413 = scmp.eq.s32.totalorder %s41, 1
      %p414 = scmp.ne.s32.totalorder %s409, %s411
      %p415 = scmp.eq.s32.totalorder %s41, 0
      %p416 = por %p414, %p415
      %p417 = scmp.ne.s32.totalorder %s409, %s411
      %p418 = scmp.eq.s32.totalorder %s46, 1
      %p419 = por %p417, %p418
      %p420 = scmp.ne.s32.totalorder %s411, %s412
      %p421 = scmp.eq.s32.totalorder %s46, 0
      %p422 = por %p420, %p421
      %p423 = scmp.ne.s32.totalorder %s411, %s412
      %p424 = scmp.eq.s32.totalorder %s47, 1
      %p425 = por %p423, %p424
      %p427 = scmp.ne.s32.totalorder %s412, %s426
      %p428 = scmp.eq.s32.totalorder %s47, 0
      %p429 = por %p427, %p428
      %s431 = sadd.s32 %s430, 1
      %p434 = scmp.eq.s32.totalorder %s41, 1
      %p435 = scmp.ne.s32.totalorder %s430, %s432
      %p436 = scmp.eq.s32.totalorder %s41, 0
      %p437 = por %p435, %p436
      %p438 = scmp.ne.s32.totalorder %s430, %s432
      %p439 = scmp.eq.s32.totalorder %s46, 1
      %p440 = por %p438, %p439
      %p441 = scmp.ne.s32.totalorder %s432, %s433
      %p442 = scmp.eq.s32.totalorder %s46, 0
      %p443 = por %p441, %p442
      %p444 = scmp.ne.s32.totalorder %s432, %s433
      %p445 = scmp.eq.s32.totalorder %s47, 1
      %p446 = por %p444, %p445
      %p448 = scmp.ne.s32.totalorder %s433, %s447
      %p449 = scmp.eq.s32.totalorder %s47, 0
      %p450 = por %p448, %p449
      %s451 = ssub.s32 %s48, %s60
      %s452 = ssub.s32 %s49, %s56
      %s453 = sor.u32 %s451, %s452
      %p454 = scmp.eq.s32.totalorder %s453, 0
      %s456 = sadd.s32 %s455, 1
      %s457 = scalar_select %p454, %s455, %s456
      %p460 = pneg %p454
      %p461 = scmp.eq.s32.totalorder %s41, 1
      %p462 = por %p460, %p461
      %p463 = scmp.ne.s32.totalorder %s455, %s458
      %p464 = scmp.eq.s32.totalorder %s41, 0
      %p465 = por %p463, %p464
      %p466 = scmp.ne.s32.totalorder %s455, %s458
      %p467 = scmp.eq.s32.totalorder %s46, 1
      %p468 = por %p466, %p467
      %p469 = scmp.ne.s32.totalorder %s458, %s459
      %p470 = scmp.eq.s32.totalorder %s46, 0
      %p471 = por %p469, %p470
      %p472 = scmp.ne.s32.totalorder %s458, %s459
      %p473 = scmp.eq.s32.totalorder %s47, 1
      %p474 = por %p472, %p473
      %p476 = scmp.ne.s32.totalorder %s459, %s475
      %p477 = scmp.eq.s32.totalorder %s47, 0
      %p478 = por %p476, %p477
      %p479 = scmp.le.s32.totalorder 1, %s41
      %p480 = scmp.lt.s32.totalorder %s41, 3
      %p481 = pnand %p479, %p480
      %p482 = pneg %p481
      // Predicated region
      $region9: #{tpu_custom_call.1} parent=5 // pred_check
        _
      $region10: #{tpu_custom_call.1} parent=5 // pred_check_branch
        %484 = sbr.rel (%p481) target = $region12
      $region11: #{tpu_custom_call.1} parent=5 // pred_region
        %s485 = ssub.s32 %s41, 1
        // Predicated region
        $region13: #{tpu_custom_call.1} parent=11 // pred_check
          %p486 = pneg %p128
        $region14: #{tpu_custom_call.1} parent=11 // pred_check_branch
          %488 = sbr.rel (%p486) target = $region16
        $region15: #{tpu_custom_call.1} parent=11 // pred_region
          %s490 = ssub.s32 2048, 2048
          %491 = vsyncadd [#allocation6], %s490
          %s492 = sshll.u32 [#allocation7], 4
          %s493 = int_to_ptr.vmem [resolvable:$true] %s492
          %498 = dma.hbm_to_vmem [thread:$0]  %s2, 2048, %s493, [#allocation6], 128, 128, 8
        $region16: #{tpu_custom_call.1} parent=11 // pred_fallthru
          _
        // Predicated region
        $region17: #{tpu_custom_call.1} parent=11 // pred_check
          %p499 = pneg %p149
        $region18: #{tpu_custom_call.1} parent=11 // pred_check_branch
          %501 = sbr.rel (%p499) target = $region20
        $region19: #{tpu_custom_call.1} parent=11 // pred_region
          %s503 = ssub.s32 16, 16
          %504 = vsyncadd [#allocation9], %s503
          %s506 = sshll.u32 [#allocation8], 4
          %s507 = int_to_ptr.vmem [resolvable:$true] %s506
          %509 = dma.hbm_to_vmem [thread:$0]  %s3, 16, %s507, [#allocation9]
        $region20: #{tpu_custom_call.1} parent=11 // pred_fallthru
          _
        // Predicated region
        $region21: #{tpu_custom_call.1} parent=11 // pred_check
          %p510 = pneg %p170
        $region22: #{tpu_custom_call.1} parent=11 // pred_check_branch
          %512 = sbr.rel (%p510) target = $region24
        $region23: #{tpu_custom_call.1} parent=11 // pred_region
          %s514 = ssub.s32 2048, 2048
          %515 = vsyncadd [#allocation9], %s514
          %s516 = sshll.u32 [#allocation10], 4
          %s517 = int_to_ptr.vmem [resolvable:$true] %s516
          %522 = dma.hbm_to_vmem [thread:$0]  %s4, 2048, %s517, [#allocation9], 128, 128, 8
        $region24: #{tpu_custom_call.1} parent=11 // pred_fallthru
          _
        // Predicated region
        $region25: #{tpu_custom_call.1} parent=11 // pred_check
          %p523 = pneg %p191
        $region26: #{tpu_custom_call.1} parent=11 // pred_check_branch
          %525 = sbr.rel (%p523) target = $region28
        $region27: #{tpu_custom_call.1} parent=11 // pred_region
          %s527 = ssub.s32 16, 16
          %528 = vsyncadd [#allocation12], %s527
          %s530 = sshll.u32 [#allocation11], 4
          %s531 = int_to_ptr.vmem [resolvable:$true] %s530
          %533 = dma.hbm_to_vmem [thread:$0]  %s5, 16, %s531, [#allocation12]
        $region28: #{tpu_custom_call.1} parent=11 // pred_fallthru
          _
        // Predicated region
        $region29: #{tpu_custom_call.1} parent=11 // pred_check
          %p534 = pneg %p212
        $region30: #{tpu_custom_call.1} parent=11 // pred_check_branch
          %536 = sbr.rel (%p534) target = $region32
        $region31: #{tpu_custom_call.1} parent=11 // pred_region
          %s538 = ssub.s32 2048, 2048
          %539 = vsyncadd [#allocation12], %s538
          %s540 = sshll.u32 [#allocation13], 4
          %s541 = int_to_ptr.vmem [resolvable:$true] %s540
          %546 = dma.hbm_to_vmem [thread:$0]  %s6, 2048, %s541, [#allocation12], 128, 128, 8
        $region32: #{tpu_custom_call.1} parent=11 // pred_fallthru
          _
        // Predicated region
        $region33: #{tpu_custom_call.1} parent=11 // pred_check
          %p547 = pneg %p233
        $region34: #{tpu_custom_call.1} parent=11 // pred_check_branch
          %549 = sbr.rel (%p547) target = $region36
        $region35: #{tpu_custom_call.1} parent=11 // pred_region
          %s551 = ssub.s32 16, 16
          %552 = vsyncadd [#allocation15], %s551
          %s554 = sshll.u32 [#allocation14], 4
          %s555 = int_to_ptr.vmem [resolvable:$true] %s554
          %557 = dma.hbm_to_vmem [thread:$0]  %s7, 16, %s555, [#allocation15]
        $region36: #{tpu_custom_call.1} parent=11 // pred_fallthru
          _
        // Predicated region
        $region37: #{tpu_custom_call.1} parent=11 // pred_check
          %p558 = pneg %p254
        $region38: #{tpu_custom_call.1} parent=11 // pred_check_branch
          %560 = sbr.rel (%p558) target = $region40
        $region39: #{tpu_custom_call.1} parent=11 // pred_region
          %s562 = ssub.s32 2048, 2048
          %563 = vsyncadd [#allocation15], %s562
          %s564 = sshll.u32 [#allocation16], 4
          %s565 = int_to_ptr.vmem [resolvable:$true] %s564
          %570 = dma.hbm_to_vmem [thread:$0]  %s8, 2048, %s565, [#allocation15], 128, 128, 8
        $region40: #{tpu_custom_call.1} parent=11 // pred_fallthru
          _
        // Predicated region
        $region41: #{tpu_custom_call.1} parent=11 // pred_check
          %p571 = pneg %p275
        $region42: #{tpu_custom_call.1} parent=11 // pred_check_branch
          %573 = sbr.rel (%p571) target = $region44
        $region43: #{tpu_custom_call.1} parent=11 // pred_region
          %s575 = ssub.s32 16, 16
          %576 = vsyncadd [#allocation18], %s575
          %s578 = sshll.u32 [#allocation17], 4
          %s579 = int_to_ptr.vmem [resolvable:$true] %s578
          %581 = dma.hbm_to_vmem [thread:$0]  %s9, 16, %s579, [#allocation18]
        $region44: #{tpu_custom_call.1} parent=11 // pred_fallthru
          _
        // Predicated region
        $region45: #{tpu_custom_call.1} parent=11 // pred_check
          %p582 = pneg %p296
        $region46: #{tpu_custom_call.1} parent=11 // pred_check_branch
          %584 = sbr.rel (%p582) target = $region48
        $region47: #{tpu_custom_call.1} parent=11 // pred_region
          %s586 = ssub.s32 16, 16
          %587 = vsyncadd [#allocation18], %s586
          %s589 = sshll.u32 [#allocation19], 4
          %s590 = int_to_ptr.vmem [resolvable:$true] %s589
          %592 = dma.hbm_to_vmem [thread:$0]  %s10, 16, %s590, [#allocation18]
        $region48: #{tpu_custom_call.1} parent=11 // pred_fallthru
          _
        // Predicated region
        $region49: #{tpu_custom_call.1} parent=11 // pred_check
          %p593 = pneg %p317
        $region50: #{tpu_custom_call.1} parent=11 // pred_check_branch
          %595 = sbr.rel (%p593) target = $region52
        $region51: #{tpu_custom_call.1} parent=11 // pred_region
          %s597 = ssub.s32 16, 16
          %598 = vsyncadd [#allocation21], %s597
          %s600 = sshll.u32 [#allocation20], 4
          %s601 = int_to_ptr.vmem [resolvable:$true] %s600
          %603 = dma.hbm_to_vmem [thread:$0]  %s11, 16, %s601, [#allocation21]
        $region52: #{tpu_custom_call.1} parent=11 // pred_fallthru
          _
        // Predicated region
        $region53: #{tpu_custom_call.1} parent=11 // pred_check
          %p604 = pneg %p338
        $region54: #{tpu_custom_call.1} parent=11 // pred_check_branch
          %606 = sbr.rel (%p604) target = $region56
        $region55: #{tpu_custom_call.1} parent=11 // pred_region
          %s608 = ssub.s32 4096, 4096
          %609 = vsyncadd [#allocation21], %s608
          %s610 = sshll.u32 [#allocation22], 4
          %s611 = int_to_ptr.vmem [resolvable:$true] %s610
          %616 = dma.hbm_to_vmem [thread:$0]  %s12, 4096, %s611, [#allocation21], 256, 256, 16
        $region56: #{tpu_custom_call.1} parent=11 // pred_fallthru
          _
        // Predicated region
        $region57: #{tpu_custom_call.1} parent=11 // pred_check
          %p617 = pneg %p359
        $region58: #{tpu_custom_call.1} parent=11 // pred_check_branch
          %619 = sbr.rel (%p617) target = $region60
        $region59: #{tpu_custom_call.1} parent=11 // pred_region
          %s621 = ssub.s32 32, 32
          %622 = vsyncadd [#allocation24], %s621
          %s624 = sshll.u32 [#allocation23], 4
          %s625 = int_to_ptr.vmem [resolvable:$true] %s624
          %627 = dma.hbm_to_vmem [thread:$0]  %s13, 32, %s625, [#allocation24]
        $region60: #{tpu_custom_call.1} parent=11 // pred_fallthru
          _
        // Predicated region
        $region61: #{tpu_custom_call.1} parent=11 // pred_check
          %p628 = pneg %p380
        $region62: #{tpu_custom_call.1} parent=11 // pred_check_branch
          %630 = sbr.rel (%p628) target = $region64
        $region63: #{tpu_custom_call.1} parent=11 // pred_region
          %s632 = ssub.s32 4096, 4096
          %633 = vsyncadd [#allocation24], %s632
          %s634 = sshll.u32 [#allocation25], 4
          %s635 = int_to_ptr.vmem [resolvable:$true] %s634
          %640 = dma.hbm_to_vmem [thread:$0]  %s14, 4096, %s635, [#allocation24], 128, 128, 8
        $region64: #{tpu_custom_call.1} parent=11 // pred_fallthru
          _
        // Predicated region
        $region65: #{tpu_custom_call.1} parent=11 // pred_check
          %p641 = pneg %p401
        $region66: #{tpu_custom_call.1} parent=11 // pred_check_branch
          %643 = sbr.rel (%p641) target = $region68
        $region67: #{tpu_custom_call.1} parent=11 // pred_region
          %s645 = ssub.s32 16, 16
          %646 = vsyncadd [#allocation27], %s645
          %s648 = sshll.u32 [#allocation26], 4
          %s649 = int_to_ptr.vmem [resolvable:$true] %s648
          %651 = dma.hbm_to_vmem [thread:$0]  %s15, 16, %s649, [#allocation27]
        $region68: #{tpu_custom_call.1} parent=11 // pred_fallthru
          _
        // Predicated region
        $region69: #{tpu_custom_call.1} parent=11 // pred_check
          %p652 = pneg %p422
        $region70: #{tpu_custom_call.1} parent=11 // pred_check_branch
          %654 = sbr.rel (%p652) target = $region72
        $region71: #{tpu_custom_call.1} parent=11 // pred_region
          %s656 = ssub.s32 16, 16
          %657 = vsyncadd [#allocation27], %s656
          %s659 = sshll.u32 [#allocation28], 4
          %s660 = int_to_ptr.vmem [resolvable:$true] %s659
          %662 = dma.hbm_to_vmem [thread:$0]  %s16, 16, %s660, [#allocation27]
        $region72: #{tpu_custom_call.1} parent=11 // pred_fallthru
          _
        // Predicated region
        $region73: #{tpu_custom_call.1} parent=11 // pred_check
          %p663 = pneg %p443
        $region74: #{tpu_custom_call.1} parent=11 // pred_check_branch
          %665 = sbr.rel (%p663) target = $region76
        $region75: #{tpu_custom_call.1} parent=11 // pred_region
          %s667 = ssub.s32 16, 16
          %668 = vsyncadd [#allocation30], %s667
          %s670 = sshll.u32 [#allocation29], 4
          %s671 = int_to_ptr.vmem [resolvable:$true] %s670
          %673 = dma.hbm_to_vmem [thread:$0]  %s17, 16, %s671, [#allocation30]
        $region76: #{tpu_custom_call.1} parent=11 // pred_fallthru
          _
      $region12: #{tpu_custom_call.1} parent=5 // pred_fallthru
        _
      %p674 = scmp.lt.s32.totalorder %s41, 2
      // Predicated region
      $region77: #{tpu_custom_call.1} parent=5 // pred_check
        %p675 = pneg %p674
      $region78: #{tpu_custom_call.1} parent=5 // pred_check_branch
        %677 = sbr.rel (%p675) target = $region80
      $region79: #{tpu_custom_call.1} parent=5 // pred_region
        // Predicated region
        $region81: #{tpu_custom_call.1} parent=79 // pred_check
          %p678 = pneg %p75
        $region82: #{tpu_custom_call.1} parent=79 // pred_check_branch
          %680 = sbr.rel (%p678) target = $region84
        $region83: #{tpu_custom_call.1} parent=79 // pred_region
          %s681 = sand.u32 %s65, 1
          %s682 = scalar_lea.sflag [#allocation3], %s681
          %s683 = sand.u32 %s65, 1
          %s684 = smul.addr %s683, 8
          %s685 = scalar_lea.vmem [#allocation2], %s684
          %s687 = ssub.s32 128, 128
          %688 = vsyncadd %s682, %s687
          %s689 = sadd.s32 %s49, %s48
          %s690 = smul.addr %s689, 128
          %s691 = scalar_lea.hbm %s0, %s690
          %s693 = sshll.u32 %s685, 4
          %s694 = int_to_ptr.vmem [resolvable:$true] %s693
          %696 = dma.hbm_to_vmem [thread:$0]  %s691, 128, %s694, %s682
        $region84: #{tpu_custom_call.1} parent=79 // pred_fallthru
          _
        // Predicated region
        $region85: #{tpu_custom_call.1} parent=79 // pred_check
          %p697 = pneg %p101
        $region86: #{tpu_custom_call.1} parent=79 // pred_check_branch
          %699 = sbr.rel (%p697) target = $region88
        $region87: #{tpu_custom_call.1} parent=79 // pred_region
          %s700 = sand.u32 %s41, 1
          %s701 = scalar_lea.sflag [#allocation6], %s700
          %s702 = sand.u32 %s91, 1
          %s703 = smul.addr %s702, 8
          %s704 = scalar_lea.vmem [#allocation5], %s703
          %s706 = ssub.s32 128, 128
          %707 = vsyncadd %s701, %s706
          %s708 = smul.addr %s48, 128
          %s709 = scalar_lea.hbm %s1, %s708
          %s711 = sshll.u32 %s704, 4
          %s712 = int_to_ptr.vmem [resolvable:$true] %s711
          %714 = dma.hbm_to_vmem [thread:$0]  %s709, 128, %s712, %s701
        $region88: #{tpu_custom_call.1} parent=79 // pred_fallthru
          _
      $region80: #{tpu_custom_call.1} parent=5 // pred_fallthru
        _
      %p715 = scmp.le.s32.totalorder 1, %s41
      %p716 = scmp.lt.s32.totalorder %s41, 3
      %p717 = pnand %p715, %p716
      %p718 = pneg %p717
      // Predicated region
      $region89: #{tpu_custom_call.1} parent=5 // pred_check
        _
      $region90: #{tpu_custom_call.1} parent=5 // pred_check_branch
        %720 = sbr.rel (%p717) target = $region92
      $region91: #{tpu_custom_call.1} parent=5 // pred_region
        %s721 = ssub.s32 %s41, 1
        %s722 = sand.u32 %s68, 1
        %s723 = scalar_lea.sflag [#allocation3], %s722
        %s724 = sand.u32 %s68, 1
        %s725 = smul.addr %s724, 8
        %s726 = scalar_lea.vmem [#allocation2], %s725
        // Predicated region
        $region93: #{tpu_custom_call.1} parent=91 // pred_check
          %p727 = pneg %p81
        $region94: #{tpu_custom_call.1} parent=91 // pred_check_branch
          %729 = sbr.rel (%p727) target = $region96
        $region95: #{tpu_custom_call.1} parent=91 // pred_region
          %730 = dma.done %s723, 128
        $region96: #{tpu_custom_call.1} parent=91 // pred_fallthru
          _
        %s731 = sand.u32 %s46, 1
        %s732 = scalar_lea.sflag [#allocation6], %s731
        %s733 = sand.u32 %s94, 1
        %s734 = smul.addr %s733, 8
        %s735 = scalar_lea.vmem [#allocation5], %s734
        // Predicated region
        $region97: #{tpu_custom_call.1} parent=91 // pred_check
          %p736 = pneg %p107
        $region98: #{tpu_custom_call.1} parent=91 // pred_check_branch
          %738 = sbr.rel (%p736) target = $region100
        $region99: #{tpu_custom_call.1} parent=91 // pred_region
          %739 = dma.done %s732, 128
        $region100: #{tpu_custom_call.1} parent=91 // pred_fallthru
          _
        // Predicated region
        $region101: #{tpu_custom_call.1} parent=91 // pred_check
          %p740 = pneg %p128
        $region102: #{tpu_custom_call.1} parent=91 // pred_check_branch
          %742 = sbr.rel (%p740) target = $region104
        $region103: #{tpu_custom_call.1} parent=91 // pred_region
          %743 = dma.done [#allocation6], 2048
        $region104: #{tpu_custom_call.1} parent=91 // pred_fallthru
          _
        // Predicated region
        $region105: #{tpu_custom_call.1} parent=91 // pred_check
          %p744 = pneg %p149
        $region106: #{tpu_custom_call.1} parent=91 // pred_check_branch
          %746 = sbr.rel (%p744) target = $region108
        $region107: #{tpu_custom_call.1} parent=91 // pred_region
          %747 = dma.done [#allocation9], 16
        $region108: #{tpu_custom_call.1} parent=91 // pred_fallthru
          _
        // Predicated region
        $region109: #{tpu_custom_call.1} parent=91 // pred_check
          %p748 = pneg %p170
        $region110: #{tpu_custom_call.1} parent=91 // pred_check_branch
          %750 = sbr.rel (%p748) target = $region112
        $region111: #{tpu_custom_call.1} parent=91 // pred_region
          %751 = dma.done [#allocation9], 2048
        $region112: #{tpu_custom_call.1} parent=91 // pred_fallthru
          _
        // Predicated region
        $region113: #{tpu_custom_call.1} parent=91 // pred_check
          %p752 = pneg %p191
        $region114: #{tpu_custom_call.1} parent=91 // pred_check_branch
          %754 = sbr.rel (%p752) target = $region116
        $region115: #{tpu_custom_call.1} parent=91 // pred_region
          %755 = dma.done [#allocation12], 16
        $region116: #{tpu_custom_call.1} parent=91 // pred_fallthru
          _
        // Predicated region
        $region117: #{tpu_custom_call.1} parent=91 // pred_check
          %p756 = pneg %p212
        $region118: #{tpu_custom_call.1} parent=91 // pred_check_branch
          %758 = sbr.rel (%p756) target = $region120
        $region119: #{tpu_custom_call.1} parent=91 // pred_region
          %759 = dma.done [#allocation12], 2048
        $region120: #{tpu_custom_call.1} parent=91 // pred_fallthru
          _
        // Predicated region
        $region121: #{tpu_custom_call.1} parent=91 // pred_check
          %p760 = pneg %p233
        $region122: #{tpu_custom_call.1} parent=91 // pred_check_branch
          %762 = sbr.rel (%p760) target = $region124
        $region123: #{tpu_custom_call.1} parent=91 // pred_region
          %763 = dma.done [#allocation15], 16
        $region124: #{tpu_custom_call.1} parent=91 // pred_fallthru
          _
        // Predicated region
        $region125: #{tpu_custom_call.1} parent=91 // pred_check
          %p764 = pneg %p254
        $region126: #{tpu_custom_call.1} parent=91 // pred_check_branch
          %766 = sbr.rel (%p764) target = $region128
        $region127: #{tpu_custom_call.1} parent=91 // pred_region
          %767 = dma.done [#allocation15], 2048
        $region128: #{tpu_custom_call.1} parent=91 // pred_fallthru
          _
        // Predicated region
        $region129: #{tpu_custom_call.1} parent=91 // pred_check
          %p768 = pneg %p275
        $region130: #{tpu_custom_call.1} parent=91 // pred_check_branch
          %770 = sbr.rel (%p768) target = $region132
        $region131: #{tpu_custom_call.1} parent=91 // pred_region
          %771 = dma.done [#allocation18], 16
        $region132: #{tpu_custom_call.1} parent=91 // pred_fallthru
          _
        // Predicated region
        $region133: #{tpu_custom_call.1} parent=91 // pred_check
          %p772 = pneg %p296
        $region134: #{tpu_custom_call.1} parent=91 // pred_check_branch
          %774 = sbr.rel (%p772) target = $region136
        $region135: #{tpu_custom_call.1} parent=91 // pred_region
          %775 = dma.done [#allocation18], 16
        $region136: #{tpu_custom_call.1} parent=91 // pred_fallthru
          _
        // Predicated region
        $region137: #{tpu_custom_call.1} parent=91 // pred_check
          %p776 = pneg %p317
        $region138: #{tpu_custom_call.1} parent=91 // pred_check_branch
          %778 = sbr.rel (%p776) target = $region140
        $region139: #{tpu_custom_call.1} parent=91 // pred_region
          %779 = dma.done [#allocation21], 16
        $region140: #{tpu_custom_call.1} parent=91 // pred_fallthru
          _
        // Predicated region
        $region141: #{tpu_custom_call.1} parent=91 // pred_check
          %p780 = pneg %p338
        $region142: #{tpu_custom_call.1} parent=91 // pred_check_branch
          %782 = sbr.rel (%p780) target = $region144
        $region143: #{tpu_custom_call.1} parent=91 // pred_region
          %783 = dma.done [#allocation21], 4096
        $region144: #{tpu_custom_call.1} parent=91 // pred_fallthru
          _
        // Predicated region
        $region145: #{tpu_custom_call.1} parent=91 // pred_check
          %p784 = pneg %p359
        $region146: #{tpu_custom_call.1} parent=91 // pred_check_branch
          %786 = sbr.rel (%p784) target = $region148
        $region147: #{tpu_custom_call.1} parent=91 // pred_region
          %787 = dma.done [#allocation24], 32
        $region148: #{tpu_custom_call.1} parent=91 // pred_fallthru
          _
        // Predicated region
        $region149: #{tpu_custom_call.1} parent=91 // pred_check
          %p788 = pneg %p380
        $region150: #{tpu_custom_call.1} parent=91 // pred_check_branch
          %790 = sbr.rel (%p788) target = $region152
        $region151: #{tpu_custom_call.1} parent=91 // pred_region
          %791 = dma.done [#allocation24], 4096
        $region152: #{tpu_custom_call.1} parent=91 // pred_fallthru
          _
        // Predicated region
        $region153: #{tpu_custom_call.1} parent=91 // pred_check
          %p792 = pneg %p401
        $region154: #{tpu_custom_call.1} parent=91 // pred_check_branch
          %794 = sbr.rel (%p792) target = $region156
        $region155: #{tpu_custom_call.1} parent=91 // pred_region
          %795 = dma.done [#allocation27], 16
        $region156: #{tpu_custom_call.1} parent=91 // pred_fallthru
          _
        // Predicated region
        $region157: #{tpu_custom_call.1} parent=91 // pred_check
          %p796 = pneg %p422
        $region158: #{tpu_custom_call.1} parent=91 // pred_check_branch
          %798 = sbr.rel (%p796) target = $region160
        $region159: #{tpu_custom_call.1} parent=91 // pred_region
          %799 = dma.done [#allocation27], 16
        $region160: #{tpu_custom_call.1} parent=91 // pred_fallthru
          _
        // Predicated region
        $region161: #{tpu_custom_call.1} parent=91 // pred_check
          %p800 = pneg %p443
        $region162: #{tpu_custom_call.1} parent=91 // pred_check_branch
          %802 = sbr.rel (%p800) target = $region164
        $region163: #{tpu_custom_call.1} parent=91 // pred_region
          %803 = dma.done [#allocation30], 16
        $region164: #{tpu_custom_call.1} parent=91 // pred_fallthru
          _
        %s804 = sand.u32 %s68, 1
        %s805 = scalar_lea.sflag [#allocation3], %s804
        %s806 = sand.u32 %s68, 1
        %s807 = smul.addr %s806, 8
        %s808 = scalar_lea.vmem [#allocation2], %s807
        %p809 = pneg %p81
        %p810 = pneg %p78
        %s811 = sand.u32 %s46, 1
        %s812 = scalar_lea.sflag [#allocation6], %s811
        %s813 = sand.u32 %s94, 1
        %s814 = smul.addr %s813, 8
        %s815 = scalar_lea.vmem [#allocation5], %s814
        %p816 = pneg %p107
        %p817 = pneg %p104
        %p818 = pneg %p128
        %p819 = pneg %p125
        %p820 = pneg %p149
        %p821 = pneg %p146
        %p822 = pneg %p170
        %p823 = pneg %p167
        %p824 = pneg %p191
        %p825 = pneg %p188
        %p826 = pneg %p212
        %p827 = pneg %p209
        %p828 = pneg %p233
        %p829 = pneg %p230
        %p830 = pneg %p254
        %p831 = pneg %p251
        %p832 = pneg %p275
        %p833 = pneg %p272
        %p834 = pneg %p296
        %p835 = pneg %p293
        %p836 = pneg %p317
        %p837 = pneg %p314
        %p838 = pneg %p338
        %p839 = pneg %p335
        %p840 = pneg %p359
        %p841 = pneg %p356
        %p842 = pneg %p380
        %p843 = pneg %p377
        %p844 = pneg %p401
        %p845 = pneg %p398
        %p846 = pneg %p422
        %p847 = pneg %p419
        %p848 = pneg %p443
        %p849 = pneg %p440
        %p850 = pneg %p471
        %p851 = pneg %p468
        %s852 = sand.u32 %s458, 1
        %s853 = scalar_lea.sflag [#allocation4], %s852
        %s854 = sand.u32 %s458, 1
        %s855 = smul.addr %s854, 8
        %s856 = scalar_lea.vmem [#allocation31], %s855
        %v858 = vld [vmem:[%s726] sm:$0xff]
        %v859 = vld [vmem:[%s735] sm:$0xff]
        %v860 = vpack.c.bf16 %v858, %v858
        %v861 = vpack.c.bf16 %v859, %v859
        %v862 = vld [vmem:[#allocation7] sm:$0xff]
        %v863 = vld [vmem:[#allocation7 + $0x8] sm:$0xff]
        %v864 = vld [vmem:[#allocation7 + $0x10] sm:$0xff]
        %v865 = vld [vmem:[#allocation7 + $0x18] sm:$0xff]
        %v866 = vld [vmem:[#allocation7 + $0x20] sm:$0xff]
        %v867 = vld [vmem:[#allocation7 + $0x28] sm:$0xff]
        %v868 = vld [vmem:[#allocation7 + $0x30] sm:$0xff]
        %v869 = vld [vmem:[#allocation7 + $0x38] sm:$0xff]
        %v870 = vld [vmem:[#allocation7 + $0x40] sm:$0xff]
        %v871 = vld [vmem:[#allocation7 + $0x48] sm:$0xff]
        %v872 = vld [vmem:[#allocation7 + $0x50] sm:$0xff]
        %v873 = vld [vmem:[#allocation7 + $0x58] sm:$0xff]
        %v874 = vld [vmem:[#allocation7 + $0x60] sm:$0xff]
        %v875 = vld [vmem:[#allocation7 + $0x68] sm:$0xff]
        %v876 = vld [vmem:[#allocation7 + $0x70] sm:$0xff]
        %v877 = vld [vmem:[#allocation7 + $0x78] sm:$0xff]
        %v878 = vpack.c.bf16 %v863, %v862
        %v879 = vpack.c.bf16 %v865, %v864
        %v880 = vpack.c.bf16 %v867, %v866
        %v881 = vpack.c.bf16 %v869, %v868
        %v882 = vpack.c.bf16 %v871, %v870
        %v883 = vpack.c.bf16 %v873, %v872
        %v884 = vpack.c.bf16 %v875, %v874
        %v885 = vpack.c.bf16 %v877, %v876
        %v886 = vld [vmem:[#allocation8] sm:$0x1]
        %v888 = vlaneseq
        %v889 = vshrl.u32 %v888, 7
        %v890 = vsub.s32 0, %v889
        %v891 = vrot.slane %v886, %v890
        %893 = vmatprep.subr.bf16.mxu0 0
        %894 = vmatpush1.bf16.msra.mxu0 %v878
        %895 = vmatprep.subr.bf16.mxu0 0
        %896 = vmatpush1.bf16.msra.mxu0 %v879
        %897 = vmatprep.subr.bf16.mxu0 0
        %898 = vmatpush1.bf16.msra.mxu0 %v880
        %899 = vmatprep.subr.bf16.mxu0 0
        %900 = vmatpush1.bf16.msra.mxu0 %v881
        %901 = vmatprep.subr.bf16.mxu0 0
        %902 = vmatpush1.bf16.msra.mxu0 %v882
        %903 = vmatprep.subr.bf16.mxu0 0
        %904 = vmatpush1.bf16.msra.mxu0 %v883
        %905 = vmatprep.subr.bf16.mxu0 0
        %906 = vmatpush1.bf16.msra.mxu0 %v884
        %907 = vmatprep.subr.bf16.mxu0 0
        %908 = vmatpush1.bf16.msra.mxu0 %v885
        %909 = vmatprep.subr.bf16.mxu0 0
        %910 = vmatpush1.bf16.msra.mxu0 0
        %911 = vmatprep.subr.bf16.mxu0 0
        %912 = vmatpush1.bf16.msra.mxu0 0
        %913 = vmatprep.subr.bf16.mxu0 0
        %914 = vmatpush1.bf16.msra.mxu0 0
        %915 = vmatprep.subr.bf16.mxu0 0
        %916 = vmatpush1.bf16.msra.mxu0 0
        %917 = vmatprep.subr.bf16.mxu0 0
        %918 = vmatpush1.bf16.msra.mxu0 0
        %919 = vmatprep.subr.bf16.mxu0 0
        %920 = vmatpush1.bf16.msra.mxu0 0
        %921 = vmatprep.subr.bf16.mxu0 0
        %922 = vmatpush1.bf16.msra.mxu0 0
        %923 = vmatprep.subr.bf16.mxu0 0
        %924 = vmatpush1.bf16.msra.mxu0 0
        %925 = vmatprep.mubr.bf16.mxu0 0
        %926 = vmatmul.mubr.bf16.gmra.mrb[0].mxu0 %v860
        %v927 = vpop.f32.mrb[0].mxu0
        %v928 = vadd.f32 %v891, %v927
        %v929 = vpop.f32.mrb[0].mxu0
        %v930 = vpop.f32.mrb[0].mxu0
        %v931 = vpop.f32.mrb[0].mxu0
        %932 = vdwg.mxu0
        %v933 = vld [vmem:[#allocation10] sm:$0xff]
        %v934 = vld [vmem:[#allocation10 + $0x8] sm:$0xff]
        %v935 = vld [vmem:[#allocation10 + $0x10] sm:$0xff]
        %v936 = vld [vmem:[#allocation10 + $0x18] sm:$0xff]
        %v937 = vld [vmem:[#allocation10 + $0x20] sm:$0xff]
        %v938 = vld [vmem:[#allocation10 + $0x28] sm:$0xff]
        %v939 = vld [vmem:[#allocation10 + $0x30] sm:$0xff]
        %v940 = vld [vmem:[#allocation10 + $0x38] sm:$0xff]
        %v941 = vld [vmem:[#allocation10 + $0x40] sm:$0xff]
        %v942 = vld [vmem:[#allocation10 + $0x48] sm:$0xff]
        %v943 = vld [vmem:[#allocation10 + $0x50] sm:$0xff]
        %v944 = vld [vmem:[#allocation10 + $0x58] sm:$0xff]
        %v945 = vld [vmem:[#allocation10 + $0x60] sm:$0xff]
        %v946 = vld [vmem:[#allocation10 + $0x68] sm:$0xff]
        %v947 = vld [vmem:[#allocation10 + $0x70] sm:$0xff]
        %v948 = vld [vmem:[#allocation10 + $0x78] sm:$0xff]
        %v949 = vpack.c.bf16 %v934, %v933
        %v950 = vpack.c.bf16 %v936, %v935
        %v951 = vpack.c.bf16 %v938, %v937
        %v952 = vpack.c.bf16 %v940, %v939
        %v953 = vpack.c.bf16 %v942, %v941
        %v954 = vpack.c.bf16 %v944, %v943
        %v955 = vpack.c.bf16 %v946, %v945
        %v956 = vpack.c.bf16 %v948, %v947
        %v957 = vld [vmem:[#allocation11] sm:$0x1]
        %v959 = vlaneseq
        %v960 = vshrl.u32 %v959, 7
        %v961 = vsub.s32 0, %v960
        %v962 = vrot.slane %v957, %v961
        %964 = vmatprep.subr.bf16.mxu0 0
        %965 = vmatpush1.bf16.msra.mxu0 %v949
        %966 = vmatprep.subr.bf16.mxu0 0
        %967 = vmatpush1.bf16.msra.mxu0 %v950
        %968 = vmatprep.subr.bf16.mxu0 0
        %969 = vmatpush1.bf16.msra.mxu0 %v951
        %970 = vmatprep.subr.bf16.mxu0 0
        %971 = vmatpush1.bf16.msra.mxu0 %v952
        %972 = vmatprep.subr.bf16.mxu0 0
        %973 = vmatpush1.bf16.msra.mxu0 %v953
        %974 = vmatprep.subr.bf16.mxu0 0
        %975 = vmatpush1.bf16.msra.mxu0 %v954
        %976 = vmatprep.subr.bf16.mxu0 0
        %977 = vmatpush1.bf16.msra.mxu0 %v955
        %978 = vmatprep.subr.bf16.mxu0 0
        %979 = vmatpush1.bf16.msra.mxu0 %v956
        %980 = vmatprep.subr.bf16.mxu0 0
        %981 = vmatpush1.bf16.msra.mxu0 0
        %982 = vmatprep.subr.bf16.mxu0 0
        %983 = vmatpush1.bf16.msra.mxu0 0
        %984 = vmatprep.subr.bf16.mxu0 0
        %985 = vmatpush1.bf16.msra.mxu0 0
        %986 = vmatprep.subr.bf16.mxu0 0
        %987 = vmatpush1.bf16.msra.mxu0 0
        %988 = vmatprep.subr.bf16.mxu0 0
        %989 = vmatpush1.bf16.msra.mxu0 0
        %990 = vmatprep.subr.bf16.mxu0 0
        %991 = vmatpush1.bf16.msra.mxu0 0
        %992 = vmatprep.subr.bf16.mxu0 0
        %993 = vmatpush1.bf16.msra.mxu0 0
        %994 = vmatprep.subr.bf16.mxu0 0
        %995 = vmatpush1.bf16.msra.mxu0 0
        %996 = vmatprep.mubr.bf16.mxu0 0
        %997 = vmatmul.mubr.bf16.gmra.mrb[0].mxu0 %v861
        %v998 = vpop.f32.mrb[0].mxu0
        %v999 = vadd.f32 %v962, %v998
        %v1000 = vpop.f32.mrb[0].mxu0
        %v1001 = vpop.f32.mrb[0].mxu0
        %v1002 = vpop.f32.mrb[0].mxu0
        %1003 = vdwg.mxu0
        %v1004 = vld [vmem:[#allocation13] sm:$0xff]
        %v1005 = vld [vmem:[#allocation13 + $0x8] sm:$0xff]
        %v1006 = vld [vmem:[#allocation13 + $0x10] sm:$0xff]
        %v1007 = vld [vmem:[#allocation13 + $0x18] sm:$0xff]
        %v1008 = vld [vmem:[#allocation13 + $0x20] sm:$0xff]
        %v1009 = vld [vmem:[#allocation13 + $0x28] sm:$0xff]
        %v1010 = vld [vmem:[#allocation13 + $0x30] sm:$0xff]
        %v1011 = vld [vmem:[#allocation13 + $0x38] sm:$0xff]
        %v1012 = vld [vmem:[#allocation13 + $0x40] sm:$0xff]
        %v1013 = vld [vmem:[#allocation13 + $0x48] sm:$0xff]
        %v1014 = vld [vmem:[#allocation13 + $0x50] sm:$0xff]
        %v1015 = vld [vmem:[#allocation13 + $0x58] sm:$0xff]
        %v1016 = vld [vmem:[#allocation13 + $0x60] sm:$0xff]
        %v1017 = vld [vmem:[#allocation13 + $0x68] sm:$0xff]
        %v1018 = vld [vmem:[#allocation13 + $0x70] sm:$0xff]
        %v1019 = vld [vmem:[#allocation13 + $0x78] sm:$0xff]
        %v1020 = vpack.c.bf16 %v1005, %v1004
        %v1021 = vpack.c.bf16 %v1007, %v1006
        %v1022 = vpack.c.bf16 %v1009, %v1008
        %v1023 = vpack.c.bf16 %v1011, %v1010
        %v1024 = vpack.c.bf16 %v1013, %v1012
        %v1025 = vpack.c.bf16 %v1015, %v1014
        %v1026 = vpack.c.bf16 %v1017, %v1016
        %v1027 = vpack.c.bf16 %v1019, %v1018
        %v1028 = vld [vmem:[#allocation14] sm:$0x1]
        %v1030 = vlaneseq
        %v1031 = vshrl.u32 %v1030, 7
        %v1032 = vsub.s32 0, %v1031
        %v1033 = vrot.slane %v1028, %v1032
        %1035 = vmatprep.subr.bf16.mxu0 0
        %1036 = vmatpush1.bf16.msra.mxu0 %v1020
        %1037 = vmatprep.subr.bf16.mxu0 0
        %1038 = vmatpush1.bf16.msra.mxu0 %v1021
        %1039 = vmatprep.subr.bf16.mxu0 0
        %1040 = vmatpush1.bf16.msra.mxu0 %v1022
        %1041 = vmatprep.subr.bf16.mxu0 0
        %1042 = vmatpush1.bf16.msra.mxu0 %v1023
        %1043 = vmatprep.subr.bf16.mxu0 0
        %1044 = vmatpush1.bf16.msra.mxu0 %v1024
        %1045 = vmatprep.subr.bf16.mxu0 0
        %1046 = vmatpush1.bf16.msra.mxu0 %v1025
        %1047 = vmatprep.subr.bf16.mxu0 0
        %1048 = vmatpush1.bf16.msra.mxu0 %v1026
        %1049 = vmatprep.subr.bf16.mxu0 0
        %1050 = vmatpush1.bf16.msra.mxu0 %v1027
        %1051 = vmatprep.subr.bf16.mxu0 0
        %1052 = vmatpush1.bf16.msra.mxu0 0
        %1053 = vmatprep.subr.bf16.mxu0 0
        %1054 = vmatpush1.bf16.msra.mxu0 0
        %1055 = vmatprep.subr.bf16.mxu0 0
        %1056 = vmatpush1.bf16.msra.mxu0 0
        %1057 = vmatprep.subr.bf16.mxu0 0
        %1058 = vmatpush1.bf16.msra.mxu0 0
        %1059 = vmatprep.subr.bf16.mxu0 0
        %1060 = vmatpush1.bf16.msra.mxu0 0
        %1061 = vmatprep.subr.bf16.mxu0 0
        %1062 = vmatpush1.bf16.msra.mxu0 0
        %1063 = vmatprep.subr.bf16.mxu0 0
        %1064 = vmatpush1.bf16.msra.mxu0 0
        %1065 = vmatprep.subr.bf16.mxu0 0
        %1066 = vmatpush1.bf16.msra.mxu0 0
        %1067 = vmatprep.mubr.bf16.mxu0 0
        %1068 = vmatmul.mubr.bf16.gmra.mrb[0].mxu0 %v861
        %v1069 = vpop.f32.mrb[0].mxu0
        %v1070 = vadd.f32 %v1033, %v1069
        %v1071 = vpop.f32.mrb[0].mxu0
        %v1072 = vpop.f32.mrb[0].mxu0
        %v1073 = vpop.f32.mrb[0].mxu0
        %1074 = vdwg.mxu0
        %v1075 = vmul.f32 %v928, 0.17677669
        %1077 = vrot.lane.b32.xlu0 %v1075, 96
        %v1078 = vpop.permute.xlu0 %1077
        %1080 = vrot.lane.b32.xlu0 %v1075, 64
        %v1081 = vpop.permute.xlu0 %1080
        %1083 = vrot.lane.b32.xlu0 %v1075, 32
        %v1084 = vpop.permute.xlu0 %1083
        %v1086 = vpack.c.bf16 %v1075, %v1075
        %v1087 = vpack.c.bf16 %v1078, %v1078
        %v1088 = vpack.c.bf16 %v1081, %v1081
        %v1089 = vpack.c.bf16 %v1084, %v1084
        %1091 = vrot.lane.b32.xlu0 %v999, 96
        %v1092 = vpop.permute.xlu0 %1091
        %1094 = vrot.lane.b32.xlu0 %v999, 64
        %v1095 = vpop.permute.xlu0 %1094
        %1097 = vrot.lane.b32.xlu0 %v999, 32
        %v1098 = vpop.permute.xlu0 %1097
        %v1100 = vpack.c.bf16 %v999, %v999
        %v1101 = vpack.c.bf16 %v1092, %v1092
        %v1102 = vpack.c.bf16 %v1095, %v1095
        %v1103 = vpack.c.bf16 %v1098, %v1098
        %1105 = vrot.lane.b32.xlu0 %v1070, 96
        %v1106 = vpop.permute.xlu0 %1105
        %1108 = vrot.lane.b32.xlu0 %v1070, 64
        %v1109 = vpop.permute.xlu0 %1108
        %1111 = vrot.lane.b32.xlu0 %v1070, 32
        %v1112 = vpop.permute.xlu0 %1111
        %v1114 = vpack.c.bf16 %v1070, %v1070
        %v1115 = vpack.c.bf16 %v1106, %v1106
        %v1116 = vpack.c.bf16 %v1109, %v1109
        %v1117 = vpack.c.bf16 %v1112, %v1112
        %vm1118 = vcmask 261120
        %v1120 = vsel %vm1118, %v1086, 0
        %v1123 = vsel %vm1118, %v1100, 0
        %1125 = vmatprep.subr.bf16.mxu0 0
        %1126 = vmatpush1.bf16.xpose.msra.mxu0 %v1123
        %1127 = vmatprep.subr.bf16.mxu0 0
        %1128 = vmatpush1.bf16.xpose.msra.mxu0 0
        %1129 = vmatprep.subr.bf16.mxu0 0
        %1130 = vmatpush1.bf16.xpose.msra.mxu0 0
        %1131 = vmatprep.subr.bf16.mxu0 0
        %1132 = vmatpush1.bf16.xpose.msra.mxu0 0
        %1133 = vmatprep.subr.bf16.mxu0 0
        %1134 = vmatpush1.bf16.xpose.msra.mxu0 0
        %1135 = vmatprep.subr.bf16.mxu0 0
        %1136 = vmatpush1.bf16.xpose.msra.mxu0 0
        %1137 = vmatprep.subr.bf16.mxu0 0
        %1138 = vmatpush1.bf16.xpose.msra.mxu0 0
        %1139 = vmatprep.subr.bf16.mxu0 0
        %1140 = vmatpush1.bf16.xpose.msra.mxu0 0
        %1141 = vmatprep.subr.bf16.mxu0 0
        %1142 = vmatpush1.bf16.xpose.msra.mxu0 0
        %1143 = vmatprep.subr.bf16.mxu0 0
        %1144 = vmatpush1.bf16.xpose.msra.mxu0 0
        %1145 = vmatprep.subr.bf16.mxu0 0
        %1146 = vmatpush1.bf16.xpose.msra.mxu0 0
        %1147 = vmatprep.subr.bf16.mxu0 0
        %1148 = vmatpush1.bf16.xpose.msra.mxu0 0
        %1149 = vmatprep.subr.bf16.mxu0 0
        %1150 = vmatpush1.bf16.xpose.msra.mxu0 0
        %1151 = vmatprep.subr.bf16.mxu0 0
        %1152 = vmatpush1.bf16.xpose.msra.mxu0 0
        %1153 = vmatprep.subr.bf16.mxu0 0
        %1154 = vmatpush1.bf16.xpose.msra.mxu0 0
        %1155 = vmatprep.subr.bf16.mxu0 0
        %1156 = vmatpush1.bf16.xpose.msra.mxu0 0
        %1157 = vmatprep.mubr.bf16.mxu0 0
        %1158 = vmatmul.mubr.bf16.gmra.mrb[0].mxu0 %v1120
        %v1159 = vpop.f32.mrb[0].mxu0
        %v1160 = vadd.f32 0.0, %v1159
        %v1161 = vpop.f32.mrb[0].mxu0
        %v1162 = vpop.f32.mrb[0].mxu0
        %v1163 = vpop.f32.mrb[0].mxu0
        %1164 = vdwg.mxu0
        %v1166 = vsel %vm1118, %v1087, 0
        %v1169 = vsel %vm1118, %v1101, 0
        %1171 = vmatprep.subr.bf16.mxu0 0
        %1172 = vmatpush1.bf16.xpose.msra.mxu0 %v1169
        %1173 = vmatprep.subr.bf16.mxu0 0
        %1174 = vmatpush1.bf16.xpose.msra.mxu0 0
        %1175 = vmatprep.subr.bf16.mxu0 0
        %1176 = vmatpush1.bf16.xpose.msra.mxu0 0
        %1177 = vmatprep.subr.bf16.mxu0 0
        %1178 = vmatpush1.bf16.xpose.msra.mxu0 0
        %1179 = vmatprep.subr.bf16.mxu0 0
        %1180 = vmatpush1.bf16.xpose.msra.mxu0 0
        %1181 = vmatprep.subr.bf16.mxu0 0
        %1182 = vmatpush1.bf16.xpose.msra.mxu0 0
        %1183 = vmatprep.subr.bf16.mxu0 0
        %1184 = vmatpush1.bf16.xpose.msra.mxu0 0
        %1185 = vmatprep.subr.bf16.mxu0 0
        %1186 = vmatpush1.bf16.xpose.msra.mxu0 0
        %1187 = vmatprep.subr.bf16.mxu0 0
        %1188 = vmatpush1.bf16.xpose.msra.mxu0 0
        %1189 = vmatprep.subr.bf16.mxu0 0
        %1190 = vmatpush1.bf16.xpose.msra.mxu0 0
        %1191 = vmatprep.subr.bf16.mxu0 0
        %1192 = vmatpush1.bf16.xpose.msra.mxu0 0
        %1193 = vmatprep.subr.bf16.mxu0 0
        %1194 = vmatpush1.bf16.xpose.msra.mxu0 0
        %1195 = vmatprep.subr.bf16.mxu0 0
        %1196 = vmatpush1.bf16.xpose.msra.mxu0 0
        %1197 = vmatprep.subr.bf16.mxu0 0
        %1198 = vmatpush1.bf16.xpose.msra.mxu0 0
        %1199 = vmatprep.subr.bf16.mxu0 0
        %1200 = vmatpush1.bf16.xpose.msra.mxu0 0
        %1201 = vmatprep.subr.bf16.mxu0 0
        %1202 = vmatpush1.bf16.xpose.msra.mxu0 0
        %1203 = vmatprep.mubr.bf16.mxu0 0
        %1204 = vmatmul.mubr.bf16.gmra.mrb[0].mxu0 %v1166
        %v1205 = vpop.f32.mrb[0].mxu0
        %v1206 = vadd.f32 0.0, %v1205
        %v1207 = vpop.f32.mrb[0].mxu0
        %v1208 = vpop.f32.mrb[0].mxu0
        %v1209 = vpop.f32.mrb[0].mxu0
        %1210 = vdwg.mxu0
        %v1212 = vsel %vm1118, %v1088, 0
        %v1215 = vsel %vm1118, %v1102, 0
        %1217 = vmatprep.subr.bf16.mxu0 0
        %1218 = vmatpush1.bf16.xpose.msra.mxu0 %v1215
        %1219 = vmatprep.subr.bf16.mxu0 0
        %1220 = vmatpush1.bf16.xpose.msra.mxu0 0
        %1221 = vmatprep.subr.bf16.mxu0 0
        %1222 = vmatpush1.bf16.xpose.msra.mxu0 0
        %1223 = vmatprep.subr.bf16.mxu0 0
        %1224 = vmatpush1.bf16.xpose.msra.mxu0 0
        %1225 = vmatprep.subr.bf16.mxu0 0
        %1226 = vmatpush1.bf16.xpose.msra.mxu0 0
        %1227 = vmatprep.subr.bf16.mxu0 0
        %1228 = vmatpush1.bf16.xpose.msra.mxu0 0
        %1229 = vmatprep.subr.bf16.mxu0 0
        %1230 = vmatpush1.bf16.xpose.msra.mxu0 0
        %1231 = vmatprep.subr.bf16.mxu0 0
        %1232 = vmatpush1.bf16.xpose.msra.mxu0 0
        %1233 = vmatprep.subr.bf16.mxu0 0
        %1234 = vmatpush1.bf16.xpose.msra.mxu0 0
        %1235 = vmatprep.subr.bf16.mxu0 0
        %1236 = vmatpush1.bf16.xpose.msra.mxu0 0
        %1237 = vmatprep.subr.bf16.mxu0 0
        %1238 = vmatpush1.bf16.xpose.msra.mxu0 0
        %1239 = vmatprep.subr.bf16.mxu0 0
        %1240 = vmatpush1.bf16.xpose.msra.mxu0 0
        %1241 = vmatprep.subr.bf16.mxu0 0
        %1242 = vmatpush1.bf16.xpose.msra.mxu0 0
        %1243 = vmatprep.subr.bf16.mxu0 0
        %1244 = vmatpush1.bf16.xpose.msra.mxu0 0
        %1245 = vmatprep.subr.bf16.mxu0 0
        %1246 = vmatpush1.bf16.xpose.msra.mxu0 0
        %1247 = vmatprep.subr.bf16.mxu0 0
        %1248 = vmatpush1.bf16.xpose.msra.mxu0 0
        %1249 = vmatprep.mubr.bf16.mxu0 0
        %1250 = vmatmul.mubr.bf16.gmra.mrb[0].mxu0 %v1212
        %v1251 = vpop.f32.mrb[0].mxu0
        %v1252 = vadd.f32 0.0, %v1251
        %v1253 = vpop.f32.mrb[0].mxu0
        %v1254 = vpop.f32.mrb[0].mxu0
        %v1255 = vpop.f32.mrb[0].mxu0
        %1256 = vdwg.mxu0
        %v1258 = vsel %vm1118, %v1089, 0
        %v1261 = vsel %vm1118, %v1103, 0
        %1263 = vmatprep.subr.bf16.mxu0 0
        %1264 = vmatpush1.bf16.xpose.msra.mxu0 %v1261
        %1265 = vmatprep.subr.bf16.mxu0 0
        %1266 = vmatpush1.bf16.xpose.msra.mxu0 0
        %1267 = vmatprep.subr.bf16.mxu0 0
        %1268 = vmatpush1.bf16.xpose.msra.mxu0 0
        %1269 = vmatprep.subr.bf16.mxu0 0
        %1270 = vmatpush1.bf16.xpose.msra.mxu0 0
        %1271 = vmatprep.subr.bf16.mxu0 0
        %1272 = vmatpush1.bf16.xpose.msra.mxu0 0
        %1273 = vmatprep.subr.bf16.mxu0 0
        %1274 = vmatpush1.bf16.xpose.msra.mxu0 0
        %1275 = vmatprep.subr.bf16.mxu0 0
        %1276 = vmatpush1.bf16.xpose.msra.mxu0 0
        %1277 = vmatprep.subr.bf16.mxu0 0
        %1278 = vmatpush1.bf16.xpose.msra.mxu0 0
        %1279 = vmatprep.subr.bf16.mxu0 0
        %1280 = vmatpush1.bf16.xpose.msra.mxu0 0
        %1281 = vmatprep.subr.bf16.mxu0 0
        %1282 = vmatpush1.bf16.xpose.msra.mxu0 0
        %1283 = vmatprep.subr.bf16.mxu0 0
        %1284 = vmatpush1.bf16.xpose.msra.mxu0 0
        %1285 = vmatprep.subr.bf16.mxu0 0
        %1286 = vmatpush1.bf16.xpose.msra.mxu0 0
        %1287 = vmatprep.subr.bf16.mxu0 0
        %1288 = vmatpush1.bf16.xpose.msra.mxu0 0
        %1289 = vmatprep.subr.bf16.mxu0 0
        %1290 = vmatpush1.bf16.xpose.msra.mxu0 0
        %1291 = vmatprep.subr.bf16.mxu0 0
        %1292 = vmatpush1.bf16.xpose.msra.mxu0 0
        %1293 = vmatprep.subr.bf16.mxu0 0
        %1294 = vmatpush1.bf16.xpose.msra.mxu0 0
        %1295 = vmatprep.mubr.bf16.mxu0 0
        %1296 = vmatmul.mubr.bf16.gmra.mrb[0].mxu0 %v1258
        %v1297 = vpop.f32.mrb[0].mxu0
        %v1298 = vadd.f32 0.0, %v1297
        %v1299 = vpop.f32.mrb[0].mxu0
        %v1300 = vpop.f32.mrb[0].mxu0
        %v1301 = vpop.f32.mrb[0].mxu0
        %1302 = vdwg.mxu0
        %vm1303 = vcmask 64512
        %v1304 = vsel %vm1303, %v1160, -inf
        %1305 = vmax.xlane.f32.xlu0 %v1304
        %v1306 = vpop.xlane.xlu0 %1305
        %v1307 = vsel %vm1303, %v1206, -inf
        %1308 = vmax.xlane.f32.xlu0 %v1307
        %v1309 = vpop.xlane.xlu0 %1308
        %v1310 = vsel %vm1303, %v1252, -inf
        %1311 = vmax.xlane.f32.xlu0 %v1310
        %v1312 = vpop.xlane.xlu0 %1311
        %v1313 = vsel %vm1303, %v1298, -inf
        %1314 = vmax.xlane.f32.xlu0 %v1313
        %v1315 = vpop.xlane.xlu0 %1314
        %v1316 = vsub.f32 %v1160, %v1306
        %v1317 = vsub.f32 %v1206, %v1309
        %v1318 = vsub.f32 %v1252, %v1312
        %v1319 = vsub.f32 %v1298, %v1315
        %v1320 = vmul.f32 %v1316, 1.442695
        %v1321 = vpow.pop %v1320
        %v1322 = vmul.f32 %v1317, 1.442695
        %v1323 = vpow.pop %v1322
        %v1324 = vmul.f32 %v1318, 1.442695
        %v1325 = vpow.pop %v1324
        %v1326 = vmul.f32 %v1319, 1.442695
        %v1327 = vpow.pop %v1326
        %v1328 = vsel %vm1303, %v1321, 0.0
        %1329 = vadd.xlane.f32.xlu0 %v1328
        %v1330 = vpop.xlane.xlu0 %1329
        %v1331 = vsel %vm1303, %v1323, 0.0
        %1332 = vadd.xlane.f32.xlu0 %v1331
        %v1333 = vpop.xlane.xlu0 %1332
        %v1334 = vsel %vm1303, %v1325, 0.0
        %1335 = vadd.xlane.f32.xlu0 %v1334
        %v1336 = vpop.xlane.xlu0 %1335
        %v1337 = vsel %vm1303, %v1327, 0.0
        %1338 = vadd.xlane.f32.xlu0 %v1337
        %v1339 = vpop.xlane.xlu0 %1338
        %v1340 = vrcp.pop %v1330
        %v1341 = vrcp.pop %v1333
        %v1342 = vrcp.pop %v1336
        %v1343 = vrcp.pop %v1339
        %v1344 = vmul.f32 %v1321, %v1340
        %v1345 = vmul.f32 %v1323, %v1341
        %v1346 = vmul.f32 %v1325, %v1342
        %v1347 = vmul.f32 %v1327, %v1343
        %v1348 = vpack.c.bf16 %v1344, %v1344
        %v1349 = vpack.c.bf16 %v1345, %v1345
        %v1350 = vpack.c.bf16 %v1346, %v1346
        %v1351 = vpack.c.bf16 %v1347, %v1347
        %v1353 = vsel %vm1303, %v1348, 0
        %vm1355 = vcmask 1043456
        %v1357 = vsel %vm1355, %v1114, 0
        %1359 = vmatprep.subr.bf16.mxu0 0
        %1360 = vmatpush1.bf16.msra.mxu0 %v1357
        %1361 = vmatprep.subr.bf16.mxu0 0
        %1362 = vmatpush1.bf16.msra.mxu0 0
        %1363 = vmatprep.subr.bf16.mxu0 0
        %1364 = vmatpush1.bf16.msra.mxu0 0
        %1365 = vmatprep.subr.bf16.mxu0 0
        %1366 = vmatpush1.bf16.msra.mxu0 0
        %1367 = vmatprep.subr.bf16.mxu0 0
        %1368 = vmatpush1.bf16.msra.mxu0 0
        %1369 = vmatprep.subr.bf16.mxu0 0
        %1370 = vmatpush1.bf16.msra.mxu0 0
        %1371 = vmatprep.subr.bf16.mxu0 0
        %1372 = vmatpush1.bf16.msra.mxu0 0
        %1373 = vmatprep.subr.bf16.mxu0 0
        %1374 = vmatpush1.bf16.msra.mxu0 0
        %1375 = vmatprep.subr.bf16.mxu0 0
        %1376 = vmatpush1.bf16.msra.mxu0 0
        %1377 = vmatprep.subr.bf16.mxu0 0
        %1378 = vmatpush1.bf16.msra.mxu0 0
        %1379 = vmatprep.subr.bf16.mxu0 0
        %1380 = vmatpush1.bf16.msra.mxu0 0
        %1381 = vmatprep.subr.bf16.mxu0 0
        %1382 = vmatpush1.bf16.msra.mxu0 0
        %1383 = vmatprep.subr.bf16.mxu0 0
        %1384 = vmatpush1.bf16.msra.mxu0 0
        %1385 = vmatprep.subr.bf16.mxu0 0
        %1386 = vmatpush1.bf16.msra.mxu0 0
        %1387 = vmatprep.subr.bf16.mxu0 0
        %1388 = vmatpush1.bf16.msra.mxu0 0
        %1389 = vmatprep.subr.bf16.mxu0 0
        %1390 = vmatpush1.bf16.msra.mxu0 0
        %1391 = vmatprep.mubr.bf16.mxu0 0
        %1392 = vmatmul.mubr.bf16.gmra.mrb[0].mxu0 %v1353
        %v1393 = vpop.f32.mrb[0].mxu0
        %v1394 = vadd.f32 0.0, %v1393
        %v1395 = vpop.f32.mrb[0].mxu0
        %v1396 = vpop.f32.mrb[0].mxu0
        %v1397 = vpop.f32.mrb[0].mxu0
        %1398 = vdwg.mxu0
        %v1400 = vsel %vm1303, %v1349, 0
        %v1403 = vsel %vm1355, %v1115, 0
        %1405 = vmatprep.subr.bf16.mxu0 0
        %1406 = vmatpush1.bf16.msra.mxu0 %v1403
        %1407 = vmatprep.subr.bf16.mxu0 0
        %1408 = vmatpush1.bf16.msra.mxu0 0
        %1409 = vmatprep.subr.bf16.mxu0 0
        %1410 = vmatpush1.bf16.msra.mxu0 0
        %1411 = vmatprep.subr.bf16.mxu0 0
        %1412 = vmatpush1.bf16.msra.mxu0 0
        %1413 = vmatprep.subr.bf16.mxu0 0
        %1414 = vmatpush1.bf16.msra.mxu0 0
        %1415 = vmatprep.subr.bf16.mxu0 0
        %1416 = vmatpush1.bf16.msra.mxu0 0
        %1417 = vmatprep.subr.bf16.mxu0 0
        %1418 = vmatpush1.bf16.msra.mxu0 0
        %1419 = vmatprep.subr.bf16.mxu0 0
        %1420 = vmatpush1.bf16.msra.mxu0 0
        %1421 = vmatprep.subr.bf16.mxu0 0
        %1422 = vmatpush1.bf16.msra.mxu0 0
        %1423 = vmatprep.subr.bf16.mxu0 0
        %1424 = vmatpush1.bf16.msra.mxu0 0
        %1425 = vmatprep.subr.bf16.mxu0 0
        %1426 = vmatpush1.bf16.msra.mxu0 0
        %1427 = vmatprep.subr.bf16.mxu0 0
        %1428 = vmatpush1.bf16.msra.mxu0 0
        %1429 = vmatprep.subr.bf16.mxu0 0
        %1430 = vmatpush1.bf16.msra.mxu0 0
        %1431 = vmatprep.subr.bf16.mxu0 0
        %1432 = vmatpush1.bf16.msra.mxu0 0
        %1433 = vmatprep.subr.bf16.mxu0 0
        %1434 = vmatpush1.bf16.msra.mxu0 0
        %1435 = vmatprep.subr.bf16.mxu0 0
        %1436 = vmatpush1.bf16.msra.mxu0 0
        %1437 = vmatprep.mubr.bf16.mxu0 0
        %1438 = vmatmul.mubr.bf16.gmra.mrb[0].mxu0 %v1400
        %v1439 = vpop.f32.mrb[0].mxu0
        %v1440 = vadd.f32 0.0, %v1439
        %v1441 = vpop.f32.mrb[0].mxu0
        %v1442 = vpop.f32.mrb[0].mxu0
        %v1443 = vpop.f32.mrb[0].mxu0
        %1444 = vdwg.mxu0
        %v1446 = vsel %vm1303, %v1350, 0
        %v1449 = vsel %vm1355, %v1116, 0
        %1451 = vmatprep.subr.bf16.mxu0 0
        %1452 = vmatpush1.bf16.msra.mxu0 %v1449
        %1453 = vmatprep.subr.bf16.mxu0 0
        %1454 = vmatpush1.bf16.msra.mxu0 0
        %1455 = vmatprep.subr.bf16.mxu0 0
        %1456 = vmatpush1.bf16.msra.mxu0 0
        %1457 = vmatprep.subr.bf16.mxu0 0
        %1458 = vmatpush1.bf16.msra.mxu0 0
        %1459 = vmatprep.subr.bf16.mxu0 0
        %1460 = vmatpush1.bf16.msra.mxu0 0
        %1461 = vmatprep.subr.bf16.mxu0 0
        %1462 = vmatpush1.bf16.msra.mxu0 0
        %1463 = vmatprep.subr.bf16.mxu0 0
        %1464 = vmatpush1.bf16.msra.mxu0 0
        %1465 = vmatprep.subr.bf16.mxu0 0
        %1466 = vmatpush1.bf16.msra.mxu0 0
        %1467 = vmatprep.subr.bf16.mxu0 0
        %1468 = vmatpush1.bf16.msra.mxu0 0
        %1469 = vmatprep.subr.bf16.mxu0 0
        %1470 = vmatpush1.bf16.msra.mxu0 0
        %1471 = vmatprep.subr.bf16.mxu0 0
        %1472 = vmatpush1.bf16.msra.mxu0 0
        %1473 = vmatprep.subr.bf16.mxu0 0
        %1474 = vmatpush1.bf16.msra.mxu0 0
        %1475 = vmatprep.subr.bf16.mxu0 0
        %1476 = vmatpush1.bf16.msra.mxu0 0
        %1477 = vmatprep.subr.bf16.mxu0 0
        %1478 = vmatpush1.bf16.msra.mxu0 0
        %1479 = vmatprep.subr.bf16.mxu0 0
        %1480 = vmatpush1.bf16.msra.mxu0 0
        %1481 = vmatprep.subr.bf16.mxu0 0
        %1482 = vmatpush1.bf16.msra.mxu0 0
        %1483 = vmatprep.mubr.bf16.mxu0 0
        %1484 = vmatmul.mubr.bf16.gmra.mrb[0].mxu0 %v1446
        %v1485 = vpop.f32.mrb[0].mxu0
        %v1486 = vadd.f32 0.0, %v1485
        %v1487 = vpop.f32.mrb[0].mxu0
        %v1488 = vpop.f32.mrb[0].mxu0
        %v1489 = vpop.f32.mrb[0].mxu0
        %1490 = vdwg.mxu0
        %v1492 = vsel %vm1303, %v1351, 0
        %v1495 = vsel %vm1355, %v1117, 0
        %1497 = vmatprep.subr.bf16.mxu0 0
        %1498 = vmatpush1.bf16.msra.mxu0 %v1495
        %1499 = vmatprep.subr.bf16.mxu0 0
        %1500 = vmatpush1.bf16.msra.mxu0 0
        %1501 = vmatprep.subr.bf16.mxu0 0
        %1502 = vmatpush1.bf16.msra.mxu0 0
        %1503 = vmatprep.subr.bf16.mxu0 0
        %1504 = vmatpush1.bf16.msra.mxu0 0
        %1505 = vmatprep.subr.bf16.mxu0 0
        %1506 = vmatpush1.bf16.msra.mxu0 0
        %1507 = vmatprep.subr.bf16.mxu0 0
        %1508 = vmatpush1.bf16.msra.mxu0 0
        %1509 = vmatprep.subr.bf16.mxu0 0
        %1510 = vmatpush1.bf16.msra.mxu0 0
        %1511 = vmatprep.subr.bf16.mxu0 0
        %1512 = vmatpush1.bf16.msra.mxu0 0
        %1513 = vmatprep.subr.bf16.mxu0 0
        %1514 = vmatpush1.bf16.msra.mxu0 0
        %1515 = vmatprep.subr.bf16.mxu0 0
        %1516 = vmatpush1.bf16.msra.mxu0 0
        %1517 = vmatprep.subr.bf16.mxu0 0
        %1518 = vmatpush1.bf16.msra.mxu0 0
        %1519 = vmatprep.subr.bf16.mxu0 0
        %1520 = vmatpush1.bf16.msra.mxu0 0
        %1521 = vmatprep.subr.bf16.mxu0 0
        %1522 = vmatpush1.bf16.msra.mxu0 0
        %1523 = vmatprep.subr.bf16.mxu0 0
        %1524 = vmatpush1.bf16.msra.mxu0 0
        %1525 = vmatprep.subr.bf16.mxu0 0
        %1526 = vmatpush1.bf16.msra.mxu0 0
        %1527 = vmatprep.subr.bf16.mxu0 0
        %1528 = vmatpush1.bf16.msra.mxu0 0
        %1529 = vmatprep.mubr.bf16.mxu0 0
        %1530 = vmatmul.mubr.bf16.gmra.mrb[0].mxu0 %v1492
        %v1531 = vpop.f32.mrb[0].mxu0
        %v1532 = vadd.f32 0.0, %v1531
        %v1533 = vpop.f32.mrb[0].mxu0
        %v1534 = vpop.f32.mrb[0].mxu0
        %v1535 = vpop.f32.mrb[0].mxu0
        %1536 = vdwg.mxu0
        %v1537 = vpack.c.bf16 %v1394, %v1394
        %v1538 = vpack.c.bf16 %v1440, %v1440
        %v1539 = vpack.c.bf16 %v1486, %v1486
        %v1540 = vpack.c.bf16 %v1532, %v1532
        %v1541 = vld [vmem:[#allocation16] sm:$0xff]
        %v1542 = vld [vmem:[#allocation16 + $0x8] sm:$0xff]
        %v1543 = vld [vmem:[#allocation16 + $0x10] sm:$0xff]
        %v1544 = vld [vmem:[#allocation16 + $0x18] sm:$0xff]
        %v1545 = vld [vmem:[#allocation16 + $0x20] sm:$0xff]
        %v1546 = vld [vmem:[#allocation16 + $0x28] sm:$0xff]
        %v1547 = vld [vmem:[#allocation16 + $0x30] sm:$0xff]
        %v1548 = vld [vmem:[#allocation16 + $0x38] sm:$0xff]
        %v1549 = vld [vmem:[#allocation16 + $0x40] sm:$0xff]
        %v1550 = vld [vmem:[#allocation16 + $0x48] sm:$0xff]
        %v1551 = vld [vmem:[#allocation16 + $0x50] sm:$0xff]
        %v1552 = vld [vmem:[#allocation16 + $0x58] sm:$0xff]
        %v1553 = vld [vmem:[#allocation16 + $0x60] sm:$0xff]
        %v1554 = vld [vmem:[#allocation16 + $0x68] sm:$0xff]
        %v1555 = vld [vmem:[#allocation16 + $0x70] sm:$0xff]
        %v1556 = vld [vmem:[#allocation16 + $0x78] sm:$0xff]
        %v1557 = vpack.c.bf16 %v1542, %v1541
        %v1558 = vpack.c.bf16 %v1544, %v1543
        %v1559 = vpack.c.bf16 %v1546, %v1545
        %v1560 = vpack.c.bf16 %v1548, %v1547
        %v1561 = vpack.c.bf16 %v1550, %v1549
        %v1562 = vpack.c.bf16 %v1552, %v1551
        %v1563 = vpack.c.bf16 %v1554, %v1553
        %v1564 = vpack.c.bf16 %v1556, %v1555
        %v1566 = vsel %vm1118, %v1537, 0
        %1568 = vmatprep.subr.bf16.mxu0 0
        %1569 = vmatpush1.bf16.msra.mxu0 %v1557
        %1570 = vmatprep.subr.bf16.mxu0 0
        %1571 = vmatpush1.bf16.msra.mxu0 %v1558
        %1572 = vmatprep.subr.bf16.mxu0 0
        %1573 = vmatpush1.bf16.msra.mxu0 0
        %1574 = vmatprep.subr.bf16.mxu0 0
        %1575 = vmatpush1.bf16.msra.mxu0 0
        %1576 = vmatprep.subr.bf16.mxu0 0
        %1577 = vmatpush1.bf16.msra.mxu0 0
        %1578 = vmatprep.subr.bf16.mxu0 0
        %1579 = vmatpush1.bf16.msra.mxu0 0
        %1580 = vmatprep.subr.bf16.mxu0 0
        %1581 = vmatpush1.bf16.msra.mxu0 0
        %1582 = vmatprep.subr.bf16.mxu0 0
        %1583 = vmatpush1.bf16.msra.mxu0 0
        %1584 = vmatprep.subr.bf16.mxu0 0
        %1585 = vmatpush1.bf16.msra.mxu0 0
        %1586 = vmatprep.subr.bf16.mxu0 0
        %1587 = vmatpush1.bf16.msra.mxu0 0
        %1588 = vmatprep.subr.bf16.mxu0 0
        %1589 = vmatpush1.bf16.msra.mxu0 0
        %1590 = vmatprep.subr.bf16.mxu0 0
        %1591 = vmatpush1.bf16.msra.mxu0 0
        %1592 = vmatprep.subr.bf16.mxu0 0
        %1593 = vmatpush1.bf16.msra.mxu0 0
        %1594 = vmatprep.subr.bf16.mxu0 0
        %1595 = vmatpush1.bf16.msra.mxu0 0
        %1596 = vmatprep.subr.bf16.mxu0 0
        %1597 = vmatpush1.bf16.msra.mxu0 0
        %1598 = vmatprep.subr.bf16.mxu0 0
        %1599 = vmatpush1.bf16.msra.mxu0 0
        %1600 = vmatprep.mubr.bf16.mxu0 0
        %1601 = vmatmul.mubr.bf16.gmra.mrb[0].mxu0 %v1566
        %v1602 = vpop.f32.mrb[0].mxu0
        %v1603 = vadd.f32 0.0, %v1602
        %v1604 = vpop.f32.mrb[0].mxu0
        %v1605 = vpop.f32.mrb[0].mxu0
        %v1606 = vpop.f32.mrb[0].mxu0
        %1607 = vdwg.mxu0
        %v1609 = vsel %vm1118, %v1538, 0
        %1611 = vmatprep.subr.bf16.mxu0 0
        %1612 = vmatpush1.bf16.msra.mxu0 %v1559
        %1613 = vmatprep.subr.bf16.mxu0 0
        %1614 = vmatpush1.bf16.msra.mxu0 %v1560
        %1615 = vmatprep.subr.bf16.mxu0 0
        %1616 = vmatpush1.bf16.msra.mxu0 0
        %1617 = vmatprep.subr.bf16.mxu0 0
        %1618 = vmatpush1.bf16.msra.mxu0 0
        %1619 = vmatprep.subr.bf16.mxu0 0
        %1620 = vmatpush1.bf16.msra.mxu0 0
        %1621 = vmatprep.subr.bf16.mxu0 0
        %1622 = vmatpush1.bf16.msra.mxu0 0
        %1623 = vmatprep.subr.bf16.mxu0 0
        %1624 = vmatpush1.bf16.msra.mxu0 0
        %1625 = vmatprep.subr.bf16.mxu0 0
        %1626 = vmatpush1.bf16.msra.mxu0 0
        %1627 = vmatprep.subr.bf16.mxu0 0
        %1628 = vmatpush1.bf16.msra.mxu0 0
        %1629 = vmatprep.subr.bf16.mxu0 0
        %1630 = vmatpush1.bf16.msra.mxu0 0
        %1631 = vmatprep.subr.bf16.mxu0 0
        %1632 = vmatpush1.bf16.msra.mxu0 0
        %1633 = vmatprep.subr.bf16.mxu0 0
        %1634 = vmatpush1.bf16.msra.mxu0 0
        %1635 = vmatprep.subr.bf16.mxu0 0
        %1636 = vmatpush1.bf16.msra.mxu0 0
        %1637 = vmatprep.subr.bf16.mxu0 0
        %1638 = vmatpush1.bf16.msra.mxu0 0
        %1639 = vmatprep.subr.bf16.mxu0 0
        %1640 = vmatpush1.bf16.msra.mxu0 0
        %1641 = vmatprep.subr.bf16.mxu0 0
        %1642 = vmatpush1.bf16.msra.mxu0 0
        %1643 = vmatprep.mubr.bf16.mxu0 0
        %1644 = vmatmul.mubr.bf16.gmra.mrb[0].mxu0 %v1609
        %v1645 = vpop.f32.mrb[0].mxu0
        %v1646 = vadd.f32 0.0, %v1645
        %v1647 = vpop.f32.mrb[0].mxu0
        %v1648 = vpop.f32.mrb[0].mxu0
        %v1649 = vpop.f32.mrb[0].mxu0
        %1650 = vdwg.mxu0
        %v1652 = vsel %vm1118, %v1539, 0
        %1654 = vmatprep.subr.bf16.mxu0 0
        %1655 = vmatpush1.bf16.msra.mxu0 %v1561
        %1656 = vmatprep.subr.bf16.mxu0 0
        %1657 = vmatpush1.bf16.msra.mxu0 %v1562
        %1658 = vmatprep.subr.bf16.mxu0 0
        %1659 = vmatpush1.bf16.msra.mxu0 0
        %1660 = vmatprep.subr.bf16.mxu0 0
        %1661 = vmatpush1.bf16.msra.mxu0 0
        %1662 = vmatprep.subr.bf16.mxu0 0
        %1663 = vmatpush1.bf16.msra.mxu0 0
        %1664 = vmatprep.subr.bf16.mxu0 0
        %1665 = vmatpush1.bf16.msra.mxu0 0
        %1666 = vmatprep.subr.bf16.mxu0 0
        %1667 = vmatpush1.bf16.msra.mxu0 0
        %1668 = vmatprep.subr.bf16.mxu0 0
        %1669 = vmatpush1.bf16.msra.mxu0 0
        %1670 = vmatprep.subr.bf16.mxu0 0
        %1671 = vmatpush1.bf16.msra.mxu0 0
        %1672 = vmatprep.subr.bf16.mxu0 0
        %1673 = vmatpush1.bf16.msra.mxu0 0
        %1674 = vmatprep.subr.bf16.mxu0 0
        %1675 = vmatpush1.bf16.msra.mxu0 0
        %1676 = vmatprep.subr.bf16.mxu0 0
        %1677 = vmatpush1.bf16.msra.mxu0 0
        %1678 = vmatprep.subr.bf16.mxu0 0
        %1679 = vmatpush1.bf16.msra.mxu0 0
        %1680 = vmatprep.subr.bf16.mxu0 0
        %1681 = vmatpush1.bf16.msra.mxu0 0
        %1682 = vmatprep.subr.bf16.mxu0 0
        %1683 = vmatpush1.bf16.msra.mxu0 0
        %1684 = vmatprep.subr.bf16.mxu0 0
        %1685 = vmatpush1.bf16.msra.mxu0 0
        %1686 = vmatprep.mubr.bf16.mxu0 0
        %1687 = vmatmul.mubr.bf16.gmra.mrb[0].mxu0 %v1652
        %v1688 = vpop.f32.mrb[0].mxu0
        %v1689 = vadd.f32 0.0, %v1688
        %v1690 = vpop.f32.mrb[0].mxu0
        %v1691 = vpop.f32.mrb[0].mxu0
        %v1692 = vpop.f32.mrb[0].mxu0
        %1693 = vdwg.mxu0
        %v1695 = vsel %vm1118, %v1540, 0
        %1697 = vmatprep.subr.bf16.mxu0 0
        %1698 = vmatpush1.bf16.msra.mxu0 %v1563
        %1699 = vmatprep.subr.bf16.mxu0 0
        %1700 = vmatpush1.bf16.msra.mxu0 %v1564
        %1701 = vmatprep.subr.bf16.mxu0 0
        %1702 = vmatpush1.bf16.msra.mxu0 0
        %1703 = vmatprep.subr.bf16.mxu0 0
        %1704 = vmatpush1.bf16.msra.mxu0 0
        %1705 = vmatprep.subr.bf16.mxu0 0
        %1706 = vmatpush1.bf16.msra.mxu0 0
        %1707 = vmatprep.subr.bf16.mxu0 0
        %1708 = vmatpush1.bf16.msra.mxu0 0
        %1709 = vmatprep.subr.bf16.mxu0 0
        %1710 = vmatpush1.bf16.msra.mxu0 0
        %1711 = vmatprep.subr.bf16.mxu0 0
        %1712 = vmatpush1.bf16.msra.mxu0 0
        %1713 = vmatprep.subr.bf16.mxu0 0
        %1714 = vmatpush1.bf16.msra.mxu0 0
        %1715 = vmatprep.subr.bf16.mxu0 0
        %1716 = vmatpush1.bf16.msra.mxu0 0
        %1717 = vmatprep.subr.bf16.mxu0 0
        %1718 = vmatpush1.bf16.msra.mxu0 0
        %1719 = vmatprep.subr.bf16.mxu0 0
        %1720 = vmatpush1.bf16.msra.mxu0 0
        %1721 = vmatprep.subr.bf16.mxu0 0
        %1722 = vmatpush1.bf16.msra.mxu0 0
        %1723 = vmatprep.subr.bf16.mxu0 0
        %1724 = vmatpush1.bf16.msra.mxu0 0
        %1725 = vmatprep.subr.bf16.mxu0 0
        %1726 = vmatpush1.bf16.msra.mxu0 0
        %1727 = vmatprep.subr.bf16.mxu0 0
        %1728 = vmatpush1.bf16.msra.mxu0 0
        %1729 = vmatprep.mubr.bf16.mxu0 0
        %1730 = vmatmul.mubr.bf16.gmra.mrb[0].mxu0 %v1695
        %v1731 = vpop.f32.mrb[0].mxu0
        %v1732 = vadd.f32 0.0, %v1731
        %v1733 = vpop.f32.mrb[0].mxu0
        %v1734 = vpop.f32.mrb[0].mxu0
        %v1735 = vpop.f32.mrb[0].mxu0
        %1736 = vdwg.mxu0
        %v1737 = vadd.f32 %v1603, %v1646
        %v1738 = vadd.f32 %v1737, %v1689
        %v1739 = vadd.f32 %v1738, %v1732
        %v1740 = vld [vmem:[#allocation17] sm:$0x1]
        %v1742 = vlaneseq
        %v1743 = vshrl.u32 %v1742, 7
        %v1744 = vsub.s32 0, %v1743
        %v1745 = vrot.slane %v1740, %v1744
        %v1747 = vadd.f32 %v1739, %v1745
        %v1748 = vadd.f32 %v1747, %v858
        %v1749 = vld [vmem:[#allocation19] sm:$0x1]
        %v1750 = vld [vmem:[#allocation20] sm:$0x1]
        %1751 = vadd.xlane.f32.xlu0 %v1748
        %v1752 = vpop.xlane.xlu0 %1751
        %v1753 = vrcp.pop 128.0
        %v1754 = vmul.f32 %v1752, %v1753
        %v1755 = vsub.f32 %v1748, %v1754
        %v1756 = vmul.f32 %v1755, %v1755
        %1757 = vadd.xlane.f32.xlu0 %v1756
        %v1758 = vpop.xlane.xlu0 %1757
        %v1759 = vmul.f32 %v1758, %v1753
        %v1760 = vadd.f32 %v1759, 1e-06
        %v1761 = vrsqrt.pop %v1760
        %v1762 = vmul.f32 %v1755, %v1761
        %v1764 = vlaneseq
        %v1765 = vshrl.u32 %v1764, 7
        %v1766 = vsub.s32 0, %v1765
        %v1767 = vrot.slane %v1749, %v1766
        %v1769 = vmul.f32 %v1762, %v1767
        %v1771 = vlaneseq
        %v1772 = vshrl.u32 %v1771, 7
        %v1773 = vsub.s32 0, %v1772
        %v1774 = vrot.slane %v1750, %v1773
        %v1776 = vadd.f32 %v1769, %v1774
        %v1777 = vpack.c.bf16 %v1776, %v1776
        %v1778 = vld [vmem:[#allocation22] sm:$0xff]
        %v1779 = vld [vmem:[#allocation22 + $0x8] sm:$0xff]
        %v1780 = vld [vmem:[#allocation22 + $0x10] sm:$0xff]
        %v1781 = vld [vmem:[#allocation22 + $0x18] sm:$0xff]
        %v1782 = vld [vmem:[#allocation22 + $0x20] sm:$0xff]
        %v1783 = vld [vmem:[#allocation22 + $0x28] sm:$0xff]
        %v1784 = vld [vmem:[#allocation22 + $0x30] sm:$0xff]
        %v1785 = vld [vmem:[#allocation22 + $0x38] sm:$0xff]
        %v1786 = vld [vmem:[#allocation22 + $0x40] sm:$0xff]
        %v1787 = vld [vmem:[#allocation22 + $0x48] sm:$0xff]
        %v1788 = vld [vmem:[#allocation22 + $0x50] sm:$0xff]
        %v1789 = vld [vmem:[#allocation22 + $0x58] sm:$0xff]
        %v1790 = vld [vmem:[#allocation22 + $0x60] sm:$0xff]
        %v1791 = vld [vmem:[#allocation22 + $0x68] sm:$0xff]
        %v1792 = vld [vmem:[#allocation22 + $0x70] sm:$0xff]
        %v1793 = vld [vmem:[#allocation22 + $0x78] sm:$0xff]
        %v1794 = vld [vmem:[#allocation22 + $0x80] sm:$0xff]
        %v1795 = vld [vmem:[#allocation22 + $0x88] sm:$0xff]
        %v1796 = vld [vmem:[#allocation22 + $0x90] sm:$0xff]
        %v1797 = vld [vmem:[#allocation22 + $0x98] sm:$0xff]
        %v1798 = vld [vmem:[#allocation22 + $0xa0] sm:$0xff]
        %v1799 = vld [vmem:[#allocation22 + $0xa8] sm:$0xff]
        %v1800 = vld [vmem:[#allocation22 + $0xb0] sm:$0xff]
        %v1801 = vld [vmem:[#allocation22 + $0xb8] sm:$0xff]
        %v1802 = vld [vmem:[#allocation22 + $0xc0] sm:$0xff]
        %v1803 = vld [vmem:[#allocation22 + $0xc8] sm:$0xff]
        %v1804 = vld [vmem:[#allocation22 + $0xd0] sm:$0xff]
        %v1805 = vld [vmem:[#allocation22 + $0xd8] sm:$0xff]
        %v1806 = vld [vmem:[#allocation22 + $0xe0] sm:$0xff]
        %v1807 = vld [vmem:[#allocation22 + $0xe8] sm:$0xff]
        %v1808 = vld [vmem:[#allocation22 + $0xf0] sm:$0xff]
        %v1809 = vld [vmem:[#allocation22 + $0xf8] sm:$0xff]
        %v1810 = vpack.c.bf16 %v1780, %v1778
        %v1811 = vpack.c.bf16 %v1781, %v1779
        %v1812 = vpack.c.bf16 %v1784, %v1782
        %v1813 = vpack.c.bf16 %v1785, %v1783
        %v1814 = vpack.c.bf16 %v1788, %v1786
        %v1815 = vpack.c.bf16 %v1789, %v1787
        %v1816 = vpack.c.bf16 %v1792, %v1790
        %v1817 = vpack.c.bf16 %v1793, %v1791
        %v1818 = vpack.c.bf16 %v1796, %v1794
        %v1819 = vpack.c.bf16 %v1797, %v1795
        %v1820 = vpack.c.bf16 %v1800, %v1798
        %v1821 = vpack.c.bf16 %v1801, %v1799
        %v1822 = vpack.c.bf16 %v1804, %v1802
        %v1823 = vpack.c.bf16 %v1805, %v1803
        %v1824 = vpack.c.bf16 %v1808, %v1806
        %v1825 = vpack.c.bf16 %v1809, %v1807
        %v1826 = vld [vmem:[#allocation23] sm:$0x3]
        %v1828 = vlaneseq
        %v1829 = vshrl.u32 %v1828, 7
        %v1830 = vsub.s32 0, %v1829
        %v1831 = vrot.slane %v1826, %v1830
        %v1832 = vlaneseq
        %v1833 = vshrl.u32 %v1832, 7
        %v1834 = vsub.s32 1, %v1833
        %v1835 = vrot.slane %v1826, %v1834
        %1838 = vmatprep.subr.bf16.mxu0 %v1811
        %1839 = vmatpush1.bf16.msra.mxu0 %v1810
        %1840 = vmatprep.subr.bf16.mxu0 %v1813
        %1841 = vmatpush1.bf16.msra.mxu0 %v1812
        %1842 = vmatprep.subr.bf16.mxu0 %v1815
        %1843 = vmatpush1.bf16.msra.mxu0 %v1814
        %1844 = vmatprep.subr.bf16.mxu0 %v1817
        %1845 = vmatpush1.bf16.msra.mxu0 %v1816
        %1846 = vmatprep.subr.bf16.mxu0 %v1819
        %1847 = vmatpush1.bf16.msra.mxu0 %v1818
        %1848 = vmatprep.subr.bf16.mxu0 %v1821
        %1849 = vmatpush1.bf16.msra.mxu0 %v1820
        %1850 = vmatprep.subr.bf16.mxu0 %v1823
        %1851 = vmatpush1.bf16.msra.mxu0 %v1822
        %1852 = vmatprep.subr.bf16.mxu0 %v1825
        %1853 = vmatpush1.bf16.msra.mxu0 %v1824
        %1854 = vmatprep.subr.bf16.mxu0 0
        %1855 = vmatpush1.bf16.msra.mxu0 0
        %1856 = vmatprep.subr.bf16.mxu0 0
        %1857 = vmatpush1.bf16.msra.mxu0 0
        %1858 = vmatprep.subr.bf16.mxu0 0
        %1859 = vmatpush1.bf16.msra.mxu0 0
        %1860 = vmatprep.subr.bf16.mxu0 0
        %1861 = vmatpush1.bf16.msra.mxu0 0
        %1862 = vmatprep.subr.bf16.mxu0 0
        %1863 = vmatpush1.bf16.msra.mxu0 0
        %1864 = vmatprep.subr.bf16.mxu0 0
        %1865 = vmatpush1.bf16.msra.mxu0 0
        %1866 = vmatprep.subr.bf16.mxu0 0
        %1867 = vmatpush1.bf16.msra.mxu0 0
        %1868 = vmatprep.subr.bf16.mxu0 0
        %1869 = vmatpush1.bf16.msra.mxu0 0
        %1870 = vmatprep.mubr.bf16.mxu0 0
        %1871 = vmatmul.mubr.bf16.gmra.mrb[0].mxu0 %v1777
        %v1872 = vpop.f32.mrb[0].mxu0
        %v1873 = vadd.f32 %v1831, %v1872
        %v1874 = vpop.f32.mrb[0].mxu0
        %v1875 = vadd.f32 %v1835, %v1874
        %v1876 = vpop.f32.mrb[0].mxu0
        %v1877 = vpop.f32.mrb[0].mxu0
        %1878 = vdwg.mxu0
        %v1879 = vmax.f32 %v1873, 0.0
        %v1880 = vmax.f32 %v1875, 0.0
        %v1881 = vpack.c.bf16 %v1879, %v1879
        %v1882 = vpack.c.bf16 %v1880, %v1880
        %v1883 = vld [vmem:[#allocation25] sm:$0xff]
        %v1884 = vld [vmem:[#allocation25 + $0x8] sm:$0xff]
        %v1885 = vld [vmem:[#allocation25 + $0x10] sm:$0xff]
        %v1886 = vld [vmem:[#allocation25 + $0x18] sm:$0xff]
        %v1887 = vld [vmem:[#allocation25 + $0x20] sm:$0xff]
        %v1888 = vld [vmem:[#allocation25 + $0x28] sm:$0xff]
        %v1889 = vld [vmem:[#allocation25 + $0x30] sm:$0xff]
        %v1890 = vld [vmem:[#allocation25 + $0x38] sm:$0xff]
        %v1891 = vld [vmem:[#allocation25 + $0x40] sm:$0xff]
        %v1892 = vld [vmem:[#allocation25 + $0x48] sm:$0xff]
        %v1893 = vld [vmem:[#allocation25 + $0x50] sm:$0xff]
        %v1894 = vld [vmem:[#allocation25 + $0x58] sm:$0xff]
        %v1895 = vld [vmem:[#allocation25 + $0x60] sm:$0xff]
        %v1896 = vld [vmem:[#allocation25 + $0x68] sm:$0xff]
        %v1897 = vld [vmem:[#allocation25 + $0x70] sm:$0xff]
        %v1898 = vld [vmem:[#allocation25 + $0x78] sm:$0xff]
        %v1899 = vld [vmem:[#allocation25 + $0x80] sm:$0xff]
        %v1900 = vld [vmem:[#allocation25 + $0x88] sm:$0xff]
        %v1901 = vld [vmem:[#allocation25 + $0x90] sm:$0xff]
        %v1902 = vld [vmem:[#allocation25 + $0x98] sm:$0xff]
        %v1903 = vld [vmem:[#allocation25 + $0xa0] sm:$0xff]
        %v1904 = vld [vmem:[#allocation25 + $0xa8] sm:$0xff]
        %v1905 = vld [vmem:[#allocation25 + $0xb0] sm:$0xff]
        %v1906 = vld [vmem:[#allocation25 + $0xb8] sm:$0xff]
        %v1907 = vld [vmem:[#allocation25 + $0xc0] sm:$0xff]
        %v1908 = vld [vmem:[#allocation25 + $0xc8] sm:$0xff]
        %v1909 = vld [vmem:[#allocation25 + $0xd0] sm:$0xff]
        %v1910 = vld [vmem:[#allocation25 + $0xd8] sm:$0xff]
        %v1911 = vld [vmem:[#allocation25 + $0xe0] sm:$0xff]
        %v1912 = vld [vmem:[#allocation25 + $0xe8] sm:$0xff]
        %v1913 = vld [vmem:[#allocation25 + $0xf0] sm:$0xff]
        %v1914 = vld [vmem:[#allocation25 + $0xf8] sm:$0xff]
        %v1915 = vpack.c.bf16 %v1884, %v1883
        %v1916 = vpack.c.bf16 %v1886, %v1885
        %v1917 = vpack.c.bf16 %v1888, %v1887
        %v1918 = vpack.c.bf16 %v1890, %v1889
        %v1919 = vpack.c.bf16 %v1892, %v1891
        %v1920 = vpack.c.bf16 %v1894, %v1893
        %v1921 = vpack.c.bf16 %v1896, %v1895
        %v1922 = vpack.c.bf16 %v1898, %v1897
        %v1923 = vpack.c.bf16 %v1900, %v1899
        %v1924 = vpack.c.bf16 %v1902, %v1901
        %v1925 = vpack.c.bf16 %v1904, %v1903
        %v1926 = vpack.c.bf16 %v1906, %v1905
        %v1927 = vpack.c.bf16 %v1908, %v1907
        %v1928 = vpack.c.bf16 %v1910, %v1909
        %v1929 = vpack.c.bf16 %v1912, %v1911
        %v1930 = vpack.c.bf16 %v1914, %v1913
        %v1931 = vld [vmem:[#allocation26] sm:$0x1]
        %v1933 = vlaneseq
        %v1934 = vshrl.u32 %v1933, 7
        %v1935 = vsub.s32 0, %v1934
        %v1936 = vrot.slane %v1931, %v1935
        %1938 = vmatprep.subr.bf16.mxu0 0
        %1939 = vmatpush1.bf16.msra.mxu0 %v1915
        %1940 = vmatprep.subr.bf16.mxu0 0
        %1941 = vmatpush1.bf16.msra.mxu0 %v1916
        %1942 = vmatprep.subr.bf16.mxu0 0
        %1943 = vmatpush1.bf16.msra.mxu0 %v1917
        %1944 = vmatprep.subr.bf16.mxu0 0
        %1945 = vmatpush1.bf16.msra.mxu0 %v1918
        %1946 = vmatprep.subr.bf16.mxu0 0
        %1947 = vmatpush1.bf16.msra.mxu0 %v1919
        %1948 = vmatprep.subr.bf16.mxu0 0
        %1949 = vmatpush1.bf16.msra.mxu0 %v1920
        %1950 = vmatprep.subr.bf16.mxu0 0
        %1951 = vmatpush1.bf16.msra.mxu0 %v1921
        %1952 = vmatprep.subr.bf16.mxu0 0
        %1953 = vmatpush1.bf16.msra.mxu0 %v1922
        %1954 = vmatprep.subr.bf16.mxu0 0
        %1955 = vmatpush1.bf16.msra.mxu0 %v1923
        %1956 = vmatprep.subr.bf16.mxu0 0
        %1957 = vmatpush1.bf16.msra.mxu0 %v1924
        %1958 = vmatprep.subr.bf16.mxu0 0
        %1959 = vmatpush1.bf16.msra.mxu0 %v1925
        %1960 = vmatprep.subr.bf16.mxu0 0
        %1961 = vmatpush1.bf16.msra.mxu0 %v1926
        %1962 = vmatprep.subr.bf16.mxu0 0
        %1963 = vmatpush1.bf16.msra.mxu0 %v1927
        %1964 = vmatprep.subr.bf16.mxu0 0
        %1965 = vmatpush1.bf16.msra.mxu0 %v1928
        %1966 = vmatprep.subr.bf16.mxu0 0
        %1967 = vmatpush1.bf16.msra.mxu0 %v1929
        %1968 = vmatprep.subr.bf16.mxu0 0
        %1969 = vmatpush1.bf16.msra.mxu0 %v1930
        %1970 = vmatprep.mubr.bf16.mxu0 %v1882
        %1971 = vmatmul.mubr.bf16.gmra.mrb[0].mxu0 %v1881
        %v1972 = vpop.f32.mrb[0].mxu0
        %v1973 = vadd.f32 %v1936, %v1972
        %v1974 = vpop.f32.mrb[0].mxu0
        %v1975 = vpop.f32.mrb[0].mxu0
        %v1976 = vpop.f32.mrb[0].mxu0
        %1977 = vdwg.mxu0
        %v1978 = vadd.f32 %v1973, %v1776
        %v1979 = vld [vmem:[#allocation28] sm:$0x1]
        %v1980 = vld [vmem:[#allocation29] sm:$0x1]
        %1981 = vadd.xlane.f32.xlu0 %v1978
        %v1982 = vpop.xlane.xlu0 %1981
        %v1983 = vmul.f32 %v1982, %v1753
        %v1984 = vsub.f32 %v1978, %v1983
        %v1985 = vmul.f32 %v1984, %v1984
        %1986 = vadd.xlane.f32.xlu0 %v1985
        %v1987 = vpop.xlane.xlu0 %1986
        %v1988 = vmul.f32 %v1987, %v1753
        %v1989 = vadd.f32 %v1988, 1e-06
        %v1990 = vrsqrt.pop %v1989
        %v1991 = vmul.f32 %v1984, %v1990
        %v1993 = vlaneseq
        %v1994 = vshrl.u32 %v1993, 7
        %v1995 = vsub.s32 0, %v1994
        %v1996 = vrot.slane %v1979, %v1995
        %v1998 = vmul.f32 %v1991, %v1996
        %v2000 = vlaneseq
        %v2001 = vshrl.u32 %v2000, 7
        %v2002 = vsub.s32 0, %v2001
        %v2003 = vrot.slane %v1980, %v2002
        %v2005 = vadd.f32 %v1998, %v2003
        %2006 = vst [vmem:[%s856] sm:$0xff] %v2005
        %s2007 = sand.u32 %s458, 1
        %s2008 = scalar_lea.sflag [#allocation4], %s2007
        %s2009 = sand.u32 %s458, 1
        %s2010 = smul.addr %s2009, 8
        %s2011 = scalar_lea.vmem [#allocation31], %s2010
        // Predicated region
        $region165: #{tpu_custom_call.1} parent=91 // pred_check
          %p2012 = pneg %p468
        $region166: #{tpu_custom_call.1} parent=91 // pred_check_branch
          %2014 = sbr.rel (%p2012) target = $region168
        $region167: #{tpu_custom_call.1} parent=91 // pred_region
          %s2016 = ssub.s32 128, 128
          %2017 = vsyncadd %s2008, %s2016
          %s2018 = sadd.s32 %s51, %s50
          %s2019 = smul.addr %s2018, 128
          %s2020 = scalar_lea.hbm %s18, %s2019
          %s2022 = sshll.u32 %s2011, 4
          %s2023 = int_to_ptr.vmem [resolvable:$true] %s2022
          %2025 = dma.vmem_to_hbm [thread:$0]  %s2023, 128, %s2020, %s2008
        $region168: #{tpu_custom_call.1} parent=91 // pred_fallthru
          _
      $region92: #{tpu_custom_call.1} parent=5 // pred_fallthru
        _
      %p2026 = scmp.le.s32.totalorder 2, %s41
      // Predicated region
      $region169: #{tpu_custom_call.1} parent=5 // pred_check
        %p2027 = pneg %p2026
      $region170: #{tpu_custom_call.1} parent=5 // pred_check_branch
        %2029 = sbr.rel (%p2027) target = $region172
      $region171: #{tpu_custom_call.1} parent=5 // pred_region
        %s2030 = ssub.s32 %s41, 2
        // Predicated region
        $region173: #{tpu_custom_call.1} parent=171 // pred_check
          %p2031 = pneg %p474
        $region174: #{tpu_custom_call.1} parent=171 // pred_check_branch
          %2033 = sbr.rel (%p2031) target = $region176
        $region175: #{tpu_custom_call.1} parent=171 // pred_region
          %s2034 = sand.u32 %s459, 1
          %s2035 = scalar_lea.sflag [#allocation4], %s2034
          %s2036 = sand.u32 %s459, 1
          %s2037 = smul.addr %s2036, 8
          %s2038 = scalar_lea.vmem [#allocation31], %s2037
          %2039 = dma.done %s2035, 128
        $region176: #{tpu_custom_call.1} parent=171 // pred_fallthru
          _
      $region172: #{tpu_custom_call.1} parent=5 // pred_fallthru
        _
    $region6: #{tpu_custom_call.1} parent=1 // loop_footer
      %s45 = sadd.s32 1, %s41
    $region7: #{tpu_custom_call.1} parent=1 // loop_footer_branch
      %40 = sbr.rel target = $region3
    $region8: #{tpu_custom_call.1} parent=1 // loop_exit
      _
    %2040 = vsyncpa [#allocation3], 1
    %s2041 = scalar_lea.sflag [#allocation3], 1
    %2042 = vsyncpa %s2041, 1
    %2043 = vsyncpa [#allocation6], 1
    %s2044 = scalar_lea.sflag [#allocation6], 1
    %2045 = vsyncpa %s2044, 1
    %2046 = vsyncpa [#allocation9], 1
    %2047 = vsyncpa [#allocation12], 1
    %2048 = vsyncpa [#allocation15], 1
    %2049 = vsyncpa [#allocation18], 1
    %2050 = vsyncpa [#allocation21], 1
    %2051 = vsyncpa [#allocation24], 1
    %2052 = vsyncpa [#allocation27], 1
    %2053 = vsyncpa [#allocation30], 1
    %2054 = vsyncpa [#allocation4], 1
    %s2055 = scalar_lea.sflag [#allocation4], 1
    %2056 = vsyncpa %s2055, 1

</llo_original>
